<compile_context>
chip_gen: v6e
topology: v6e:2x2x1
jax: 0.10.0
libtpu: 0.0.40
codegen_flags: <defaults>
</compile_context>

<pallas_src>
import jax
import jax.numpy as jnp
from jax.experimental import pallas as pl
from jax.experimental.pallas import tpu as pltpu

EMB_TILE = 32    # wte rows gathered per grid step (DMA row gather)
LM_TM = 256      # lm-head M tile (flattened sequence rows)
LM_TV = 256      # lm-head vocab tile (rows of wte)


def _round_up(x, m):
    return ((x + m - 1) // m) * m


# ----------------------------------------------------------------------------
# Kernel 1: embedding lookup as a DMA row gather.
#   ids live in SMEM (scalar prefetch); wte stays in HBM; only the EMB_TILE
#   needed rows are DMA'd per grid step into a VMEM buffer.
# ----------------------------------------------------------------------------
def _embed_gather_kernel(ids_ref, wte_hbm, out_ref, buf, sem):
    base = pl.program_id(0) * EMB_TILE

    def row_copy(t):
        return pltpu.make_async_copy(
            wte_hbm.at[pl.ds(ids_ref[base + t], 1)],   # [1, D] row in HBM
            buf.at[pl.ds(t, 1)],                       # [1, D] row in VMEM
            sem.at[t])

    for t in range(EMB_TILE):          # static unroll: issue all row DMAs
        row_copy(t).start()
    for t in range(EMB_TILE):          # then wait for all of them
        row_copy(t).wait()
    out_ref[...] = buf[...]


def embed(ids_flat, wte):
    """ids_flat: [N] int -> [N, D] rows of wte (jnp.take semantics, clamped)."""
    n = ids_flat.shape[0]
    v, d = wte.shape
    ids = jnp.clip(ids_flat.astype(jnp.int32), 0, v - 1)   # clamp like jnp.take
    n_pad = _round_up(n, EMB_TILE)
    if n_pad != n:
        ids = jnp.pad(ids, (0, n_pad - n))
    out = pl.pallas_call(
        _embed_gather_kernel,
        out_shape=jax.ShapeDtypeStruct((n_pad, d), wte.dtype),
        grid_spec=pltpu.PrefetchScalarGridSpec(
            num_scalar_prefetch=1,                      # ids -> SMEM
            grid=(n_pad // EMB_TILE,),
            in_specs=[pl.BlockSpec(memory_space=pl.ANY)],   # wte stays in HBM
            out_specs=pl.BlockSpec((EMB_TILE, d), lambda i, ids: (i, 0)),
            scratch_shapes=[pltpu.VMEM((EMB_TILE, d), wte.dtype),
                            pltpu.SemaphoreType.DMA((EMB_TILE,))],
        ),
        compiler_params=pltpu.CompilerParams(
            dimension_semantics=("arbitrary",)),
    )(ids, wte)
    return out[:n]


# ----------------------------------------------------------------------------
# Kernel 2: tied lm_head (stand-in for `self.model`): logits = X @ wte^T
#   wte is consumed as [V, D]; the transposed contraction runs on the MXU.
#   bf16 operands, f32 accumulation, 2-D (M, V) tiling.
# ----------------------------------------------------------------------------
def _lm_head_kernel(x_ref, w_ref, o_ref):
    o_ref[...] = jax.lax.dot_general(
        x_ref[...], w_ref[...],
        dimension_numbers=(((1,), (1,)), ((), ())),   # contract on D
        preferred_element_type=jnp.float32)


def lm_head(x, wte, *, tm=LM_TM, tv=LM_TV):
    """x: [M, D] f32, wte: [V, D] f32 -> logits [M, V] f32 (tied lm head)."""
    m, d = x.shape
    v, d2 = wte.shape
    assert d == d2
    tm = min(tm, _round_up(m, 16))     # bf16 sublane packing: multiple of 16
    tv = min(tv, _round_up(v, 128))    # lane-dense output tiles
    m_pad = _round_up(m, tm)
    v_pad = _round_up(v, tv)
    x_b = x.astype(jnp.bfloat16)
    w_b = wte.astype(jnp.bfloat16)
    if m_pad != m:
        x_b = jnp.pad(x_b, ((0, m_pad - m), (0, 0)))
    if v_pad != v:
        w_b = jnp.pad(w_b, ((0, v_pad - v), (0, 0)))
    out = pl.pallas_call(
        _lm_head_kernel,
        out_shape=jax.ShapeDtypeStruct((m_pad, v_pad), jnp.float32),
        grid_spec=pltpu.PrefetchScalarGridSpec(
            num_scalar_prefetch=0,
            grid=(m_pad // tm, v_pad // tv),
            in_specs=[pl.BlockSpec((tm, d), lambda mi, vi: (mi, 0)),
                      pl.BlockSpec((tv, d), lambda mi, vi: (vi, 0))],
            out_specs=pl.BlockSpec((tm, tv), lambda mi, vi: (mi, vi)),
        ),
        compiler_params=pltpu.CompilerParams(
            dimension_semantics=("parallel", "parallel")),
    )(x_b, w_b)
    return out[:m, :v]


# ----------------------------------------------------------------------------
# Prompt_model.forward (use_fake=True, gpt2 branch)
# ----------------------------------------------------------------------------
def prompt_model_forward(params, ids_content_all, content_all_mask,
                         additional_bs, additional_bs_mask,
                         ids_content_prev_sep):
    wte = params["wte"]                      # [V, D]
    token_weights = params["token_weights"]  # [2, D]
    B, S = ids_content_all.shape
    Ssep = ids_content_prev_sep.shape[1]
    V, D = wte.shape

    # words2embedding: one fused gather for both id tensors (single launch)
    ids_cat = jnp.concatenate(
        [ids_content_all.reshape(-1), ids_content_prev_sep.reshape(-1)])
    emb = embed(ids_cat, wte)
    e_all = emb[:B * S].reshape(B, S, D)
    e_sep = emb[B * S:].reshape(B, Ssep, D)

    # get_tokens(content_prev_sep): overwrite the last two slots with the
    # learned special-token embeddings.
    e_sep = e_sep.at[:, -1].set(token_weights[-1])
    e_sep = e_sep.at[:, -2].set(token_weights[-2])

    # use_fake=True: additional_bs_tokenized <- embedded content_all
    # (the raw brain signal `additional_bs` is not consumed on this path).
    add_tok = e_all

    # get_prev (gpt2): [sep[:, :1], additional_bs_tok, sep[:, 1:]] + [content_all]
    seq = jnp.concatenate([e_sep[:, :1], add_tok, e_sep[:, 1:], e_all], axis=1)
    mask = jnp.concatenate([additional_bs_mask, content_all_mask], axis=-1)

    # TODO(synk): full pretrained transformer stood in by the tied lm_head.
    T = seq.shape[1]
    logits = lm_head(seq.reshape(B * T, D), wte).reshape(B, T, V)
    return logits, mask


if __name__ == "__main__":
    key = jax.random.PRNGKey(0)
    B, S, Ssep, D, V = 2, 8, 4, 128, 256
    BRAIN = 32  # brain-feature dim of additional_bs (unused on the fake path)

    k_wte, k_tw, k_ida, k_ids, k_bs = jax.random.split(key, 5)
    params = {
        "wte": jax.random.normal(k_wte, (V, D), jnp.float32) * 0.02,
        # token_weights: rows of wte for the 2 new special tokens (<brain/> etc.)
        "token_weights": jax.random.normal(k_tw, (2, D), jnp.float32) * 0.02,
    }

    ids_content_all = jax.random.randint(k_ida, (B, S), 0, V, jnp.int32)
    ids_content_prev_sep = jax.random.randint(k_ids, (B, Ssep), 0, V, jnp.int32)
    content_all_mask = jnp.ones((B, S), jnp.int32)
    additional_bs_mask = jnp.ones((B, S + Ssep), jnp.int32)
    additional_bs = jax.random.normal(k_bs, (B, S, BRAIN), jnp.float32)

    logits, out_mask = prompt_model_forward(
        params, ids_content_all, content_all_mask,
        additional_bs, additional_bs_mask, ids_content_prev_sep)
    jax.block_until_ready((logits, out_mask))

    # --- correctness checks --------------------------------------------------
    # 1) DMA row-gather matches jnp.take exactly (pure copy).
    emb_check = embed(ids_content_all.reshape(-1), params["wte"])
    emb_ref = jnp.take(params["wte"], ids_content_all.reshape(-1), axis=0)
    assert jnp.array_equal(emb_check, emb_ref)

    # 2) Full forward vs plain-JAX reference.  The lm_head runs bf16 on the
    #    MXU with f32 accumulation, so compare against the bf16-rounded ref.
    e_all_ref = jnp.take(params["wte"], ids_content_all, axis=0)
    e_sep_ref = jnp.take(params["wte"], ids_content_prev_sep, axis=0)
    e_sep_ref = e_sep_ref.at[:, -1].set(params["token_weights"][-1])
    e_sep_ref = e_sep_ref.at[:, -2].set(params["token_weights"][-2])
    seq_ref = jnp.concatenate(
        [e_sep_ref[:, :1], e_all_ref, e_sep_ref[:, 1:], e_all_ref], axis=1)
    logits_ref = jnp.einsum(
        "btd,vd->btv",
        seq_ref.astype(jnp.bfloat16).astype(jnp.float32),
        params["wte"].astype(jnp.bfloat16).astype(jnp.float32),
        precision=jax.lax.Precision.HIGHEST)
    mask_ref = jnp.concatenate([additional_bs_mask, content_all_mask], axis=-1)

    assert logits.shape == (B, 2 * S + Ssep, V)
    assert out_mask.shape == mask_ref.shape
    assert jnp.allclose(logits, logits_ref, atol=1e-3, rtol=1e-3)
    assert jnp.array_equal(out_mask, mask_ref)
    print("KERNEL_OK")
</pallas_src>

<mosaic_0001>
module attributes {stable_mosaic.version = 11 : i64} {
  func.func @_embed_gather_kernel(%arg0: i32, %arg1: memref<32xi32, #tpu.memory_space<smem>>, %arg2: memref<256x128xf32, #tpu.memory_space<any>>, %arg3: memref<32x128xf32, #tpu.memory_space<vmem>>, %arg4: memref<32x128xf32, #tpu.memory_space<vmem>>, %arg5: memref<32x!tpu.dma_semaphore, #tpu.memory_space<semaphore_mem>>) attributes {dimension_semantics = [#tpu.dimension_semantics<arbitrary>], iteration_bounds = array<i64: 1>, scalar_prefetch = 1 : i64, scratch_operands = 2 : i64, tpu.core_type = #tpu.core_type<tc>, window_params = [{}, {transform_indices = @transform_1, window_bounds = array<i64: 32, 128>}]} {
    %c32_i32 = arith.constant 32 : i32
    %0 = arith.muli %arg0, %c32_i32 : i32
    %c0_i32 = arith.constant 0 : i32
    %1 = arith.addi %0, %c0_i32 : i32
    %2 = arith.index_cast %1 : i32 to index
    %3 = memref.load %arg1[%2] : memref<32xi32, #tpu.memory_space<smem>>
    %c0_i32_0 = arith.constant 0 : i32
    %c0_i32_1 = arith.constant 0 : i32
    %4 = tpu.memref_slice %arg2[%3, %c0_i32_1] : memref<256x128xf32, #tpu.memory_space<any>> -> memref<1x128xf32, #tpu.memory_space<any>>
    %c0_i32_2 = arith.constant 0 : i32
    %c0_i32_3 = arith.constant 0 : i32
    %5 = tpu.memref_slice %arg4[%c0_i32_2, %c0_i32_3] : memref<32x128xf32, #tpu.memory_space<vmem>> -> memref<1x128xf32, #tpu.memory_space<vmem>>
    %6 = tpu.memref_slice %arg5[%c0_i32_0] : memref<32x!tpu.dma_semaphore, #tpu.memory_space<semaphore_mem>> -> memref<1x!tpu.dma_semaphore, #tpu.memory_space<semaphore_mem>>
    %7 = tpu.memref_squeeze %6 : memref<1x!tpu.dma_semaphore, #tpu.memory_space<semaphore_mem>> -> memref<!tpu.dma_semaphore, #tpu.memory_space<semaphore_mem>>
    tpu.enqueue_dma source(%4 : memref<1x128xf32, #tpu.memory_space<any>>) target(%5 : memref<1x128xf32, #tpu.memory_space<vmem>>) target_semaphore(%7 : memref<!tpu.dma_semaphore, #tpu.memory_space<semaphore_mem>>)
    %c1_i32 = arith.constant 1 : i32
    %8 = arith.addi %0, %c1_i32 : i32
    %9 = arith.index_cast %8 : i32 to index
    %10 = memref.load %arg1[%9] : memref<32xi32, #tpu.memory_space<smem>>
    %c1_i32_4 = arith.constant 1 : i32
    %c0_i32_5 = arith.constant 0 : i32
    %11 = tpu.memref_slice %arg2[%10, %c0_i32_5] : memref<256x128xf32, #tpu.memory_space<any>> -> memref<1x128xf32, #tpu.memory_space<any>>
    %c1_i32_6 = arith.constant 1 : i32
    %c0_i32_7 = arith.constant 0 : i32
    %12 = tpu.memref_slice %arg4[%c1_i32_6, %c0_i32_7] : memref<32x128xf32, #tpu.memory_space<vmem>> -> memref<1x128xf32, #tpu.memory_space<vmem>>
    %13 = tpu.memref_slice %arg5[%c1_i32_4] : memref<32x!tpu.dma_semaphore, #tpu.memory_space<semaphore_mem>> -> memref<1x!tpu.dma_semaphore, #tpu.memory_space<semaphore_mem>>
    %14 = tpu.memref_squeeze %13 : memref<1x!tpu.dma_semaphore, #tpu.memory_space<semaphore_mem>> -> memref<!tpu.dma_semaphore, #tpu.memory_space<semaphore_mem>>
    tpu.enqueue_dma source(%11 : memref<1x128xf32, #tpu.memory_space<any>>) target(%12 : memref<1x128xf32, #tpu.memory_space<vmem>>) target_semaphore(%14 : memref<!tpu.dma_semaphore, #tpu.memory_space<semaphore_mem>>)
    %c2_i32 = arith.constant 2 : i32
    %15 = arith.addi %0, %c2_i32 : i32
    %16 = arith.index_cast %15 : i32 to index
    %17 = memref.load %arg1[%16] : memref<32xi32, #tpu.memory_space<smem>>
    %c2_i32_8 = arith.constant 2 : i32
    %c0_i32_9 = arith.constant 0 : i32
    %18 = tpu.memref_slice %arg2[%17, %c0_i32_9] : memref<256x128xf32, #tpu.memory_space<any>> -> memref<1x128xf32, #tpu.memory_space<any>>
    %c2_i32_10 = arith.constant 2 : i32
    %c0_i32_11 = arith.constant 0 : i32
    %19 = tpu.memref_slice %arg4[%c2_i32_10, %c0_i32_11] : memref<32x128xf32, #tpu.memory_space<vmem>> -> memref<1x128xf32, #tpu.memory_space<vmem>>
    %20 = tpu.memref_slice %arg5[%c2_i32_8] : memref<32x!tpu.dma_semaphore, #tpu.memory_space<semaphore_mem>> -> memref<1x!tpu.dma_semaphore, #tpu.memory_space<semaphore_mem>>
    %21 = tpu.memref_squeeze %20 : memref<1x!tpu.dma_semaphore, #tpu.memory_space<semaphore_mem>> -> memref<!tpu.dma_semaphore, #tpu.memory_space<semaphore_mem>>
    tpu.enqueue_dma source(%18 : memref<1x128xf32, #tpu.memory_space<any>>) target(%19 : memref<1x128xf32, #tpu.memory_space<vmem>>) target_semaphore(%21 : memref<!tpu.dma_semaphore, #tpu.memory_space<semaphore_mem>>)
    %c3_i32 = arith.constant 3 : i32
    %22 = arith.addi %0, %c3_i32 : i32
    %23 = arith.index_cast %22 : i32 to index
    %24 = memref.load %arg1[%23] : memref<32xi32, #tpu.memory_space<smem>>
    %c3_i32_12 = arith.constant 3 : i32
    %c0_i32_13 = arith.constant 0 : i32
    %25 = tpu.memref_slice %arg2[%24, %c0_i32_13] : memref<256x128xf32, #tpu.memory_space<any>> -> memref<1x128xf32, #tpu.memory_space<any>>
    %c3_i32_14 = arith.constant 3 : i32
    %c0_i32_15 = arith.constant 0 : i32
    %26 = tpu.memref_slice %arg4[%c3_i32_14, %c0_i32_15] : memref<32x128xf32, #tpu.memory_space<vmem>> -> memref<1x128xf32, #tpu.memory_space<vmem>>
    %27 = tpu.memref_slice %arg5[%c3_i32_12] : memref<32x!tpu.dma_semaphore, #tpu.memory_space<semaphore_mem>> -> memref<1x!tpu.dma_semaphore, #tpu.memory_space<semaphore_mem>>
    %28 = tpu.memref_squeeze %27 : memref<1x!tpu.dma_semaphore, #tpu.memory_space<semaphore_mem>> -> memref<!tpu.dma_semaphore, #tpu.memory_space<semaphore_mem>>
    tpu.enqueue_dma source(%25 : memref<1x128xf32, #tpu.memory_space<any>>) target(%26 : memref<1x128xf32, #tpu.memory_space<vmem>>) target_semaphore(%28 : memref<!tpu.dma_semaphore, #tpu.memory_space<semaphore_mem>>)
    %c4_i32 = arith.constant 4 : i32
    %29 = arith.addi %0, %c4_i32 : i32
    %30 = arith.index_cast %29 : i32 to index
    %31 = memref.load %arg1[%30] : memref<32xi32, #tpu.memory_space<smem>>
    %c4_i32_16 = arith.constant 4 : i32
    %c0_i32_17 = arith.constant 0 : i32
    %32 = tpu.memref_slice %arg2[%31, %c0_i32_17] : memref<256x128xf32, #tpu.memory_space<any>> -> memref<1x128xf32, #tpu.memory_space<any>>
    %c4_i32_18 = arith.constant 4 : i32
    %c0_i32_19 = arith.constant 0 : i32
    %33 = tpu.memref_slice %arg4[%c4_i32_18, %c0_i32_19] : memref<32x128xf32, #tpu.memory_space<vmem>> -> memref<1x128xf32, #tpu.memory_space<vmem>>
    %34 = tpu.memref_slice %arg5[%c4_i32_16] : memref<32x!tpu.dma_semaphore, #tpu.memory_space<semaphore_mem>> -> memref<1x!tpu.dma_semaphore, #tpu.memory_space<semaphore_mem>>
    %35 = tpu.memref_squeeze %34 : memref<1x!tpu.dma_semaphore, #tpu.memory_space<semaphore_mem>> -> memref<!tpu.dma_semaphore, #tpu.memory_space<semaphore_mem>>
    tpu.enqueue_dma source(%32 : memref<1x128xf32, #tpu.memory_space<any>>) target(%33 : memref<1x128xf32, #tpu.memory_space<vmem>>) target_semaphore(%35 : memref<!tpu.dma_semaphore, #tpu.memory_space<semaphore_mem>>)
    %c5_i32 = arith.constant 5 : i32
    %36 = arith.addi %0, %c5_i32 : i32
    %37 = arith.index_cast %36 : i32 to index
    %38 = memref.load %arg1[%37] : memref<32xi32, #tpu.memory_space<smem>>
    %c5_i32_20 = arith.constant 5 : i32
    %c0_i32_21 = arith.constant 0 : i32
    %39 = tpu.memref_slice %arg2[%38, %c0_i32_21] : memref<256x128xf32, #tpu.memory_space<any>> -> memref<1x128xf32, #tpu.memory_space<any>>
    %c5_i32_22 = arith.constant 5 : i32
    %c0_i32_23 = arith.constant 0 : i32
    %40 = tpu.memref_slice %arg4[%c5_i32_22, %c0_i32_23] : memref<32x128xf32, #tpu.memory_space<vmem>> -> memref<1x128xf32, #tpu.memory_space<vmem>>
    %41 = tpu.memref_slice %arg5[%c5_i32_20] : memref<32x!tpu.dma_semaphore, #tpu.memory_space<semaphore_mem>> -> memref<1x!tpu.dma_semaphore, #tpu.memory_space<semaphore_mem>>
    %42 = tpu.memref_squeeze %41 : memref<1x!tpu.dma_semaphore, #tpu.memory_space<semaphore_mem>> -> memref<!tpu.dma_semaphore, #tpu.memory_space<semaphore_mem>>
    tpu.enqueue_dma source(%39 : memref<1x128xf32, #tpu.memory_space<any>>) target(%40 : memref<1x128xf32, #tpu.memory_space<vmem>>) target_semaphore(%42 : memref<!tpu.dma_semaphore, #tpu.memory_space<semaphore_mem>>)
    %c6_i32 = arith.constant 6 : i32
    %43 = arith.addi %0, %c6_i32 : i32
    %44 = arith.index_cast %43 : i32 to index
    %45 = memref.load %arg1[%44] : memref<32xi32, #tpu.memory_space<smem>>
    %c6_i32_24 = arith.constant 6 : i32
    %c0_i32_25 = arith.constant 0 : i32
    %46 = tpu.memref_slice %arg2[%45, %c0_i32_25] : memref<256x128xf32, #tpu.memory_space<any>> -> memref<1x128xf32, #tpu.memory_space<any>>
    %c6_i32_26 = arith.constant 6 : i32
    %c0_i32_27 = arith.constant 0 : i32
    %47 = tpu.memref_slice %arg4[%c6_i32_26, %c0_i32_27] : memref<32x128xf32, #tpu.memory_space<vmem>> -> memref<1x128xf32, #tpu.memory_space<vmem>>
    %48 = tpu.memref_slice %arg5[%c6_i32_24] : memref<32x!tpu.dma_semaphore, #tpu.memory_space<semaphore_mem>> -> memref<1x!tpu.dma_semaphore, #tpu.memory_space<semaphore_mem>>
    %49 = tpu.memref_squeeze %48 : memref<1x!tpu.dma_semaphore, #tpu.memory_space<semaphore_mem>> -> memref<!tpu.dma_semaphore, #tpu.memory_space<semaphore_mem>>
    tpu.enqueue_dma source(%46 : memref<1x128xf32, #tpu.memory_space<any>>) target(%47 : memref<1x128xf32, #tpu.memory_space<vmem>>) target_semaphore(%49 : memref<!tpu.dma_semaphore, #tpu.memory_space<semaphore_mem>>)
    %c7_i32 = arith.constant 7 : i32
    %50 = arith.addi %0, %c7_i32 : i32
    %51 = arith.index_cast %50 : i32 to index
    %52 = memref.load %arg1[%51] : memref<32xi32, #tpu.memory_space<smem>>
    %c7_i32_28 = arith.constant 7 : i32
    %c0_i32_29 = arith.constant 0 : i32
    %53 = tpu.memref_slice %arg2[%52, %c0_i32_29] : memref<256x128xf32, #tpu.memory_space<any>> -> memref<1x128xf32, #tpu.memory_space<any>>
    %c7_i32_30 = arith.constant 7 : i32
    %c0_i32_31 = arith.constant 0 : i32
    %54 = tpu.memref_slice %arg4[%c7_i32_30, %c0_i32_31] : memref<32x128xf32, #tpu.memory_space<vmem>> -> memref<1x128xf32, #tpu.memory_space<vmem>>
    %55 = tpu.memref_slice %arg5[%c7_i32_28] : memref<32x!tpu.dma_semaphore, #tpu.memory_space<semaphore_mem>> -> memref<1x!tpu.dma_semaphore, #tpu.memory_space<semaphore_mem>>
    %56 = tpu.memref_squeeze %55 : memref<1x!tpu.dma_semaphore, #tpu.memory_space<semaphore_mem>> -> memref<!tpu.dma_semaphore, #tpu.memory_space<semaphore_mem>>
    tpu.enqueue_dma source(%53 : memref<1x128xf32, #tpu.memory_space<any>>) target(%54 : memref<1x128xf32, #tpu.memory_space<vmem>>) target_semaphore(%56 : memref<!tpu.dma_semaphore, #tpu.memory_space<semaphore_mem>>)
    %c8_i32 = arith.constant 8 : i32
    %57 = arith.addi %0, %c8_i32 : i32
    %58 = arith.index_cast %57 : i32 to index
    %59 = memref.load %arg1[%58] : memref<32xi32, #tpu.memory_space<smem>>
    %c8_i32_32 = arith.constant 8 : i32
    %c0_i32_33 = arith.constant 0 : i32
    %60 = tpu.memref_slice %arg2[%59, %c0_i32_33] : memref<256x128xf32, #tpu.memory_space<any>> -> memref<1x128xf32, #tpu.memory_space<any>>
    %c8_i32_34 = arith.constant 8 : i32
    %c0_i32_35 = arith.constant 0 : i32
    %61 = tpu.memref_slice %arg4[%c8_i32_34, %c0_i32_35] : memref<32x128xf32, #tpu.memory_space<vmem>> -> memref<1x128xf32, #tpu.memory_space<vmem>>
    %62 = tpu.memref_slice %arg5[%c8_i32_32] : memref<32x!tpu.dma_semaphore, #tpu.memory_space<semaphore_mem>> -> memref<1x!tpu.dma_semaphore, #tpu.memory_space<semaphore_mem>>
    %63 = tpu.memref_squeeze %62 : memref<1x!tpu.dma_semaphore, #tpu.memory_space<semaphore_mem>> -> memref<!tpu.dma_semaphore, #tpu.memory_space<semaphore_mem>>
    tpu.enqueue_dma source(%60 : memref<1x128xf32, #tpu.memory_space<any>>) target(%61 : memref<1x128xf32, #tpu.memory_space<vmem>>) target_semaphore(%63 : memref<!tpu.dma_semaphore, #tpu.memory_space<semaphore_mem>>)
    %c9_i32 = arith.constant 9 : i32
    %64 = arith.addi %0, %c9_i32 : i32
    %65 = arith.index_cast %64 : i32 to index
    %66 = memref.load %arg1[%65] : memref<32xi32, #tpu.memory_space<smem>>
    %c9_i32_36 = arith.constant 9 : i32
    %c0_i32_37 = arith.constant 0 : i32
    %67 = tpu.memref_slice %arg2[%66, %c0_i32_37] : memref<256x128xf32, #tpu.memory_space<any>> -> memref<1x128xf32, #tpu.memory_space<any>>
    %c9_i32_38 = arith.constant 9 : i32
    %c0_i32_39 = arith.constant 0 : i32
    %68 = tpu.memref_slice %arg4[%c9_i32_38, %c0_i32_39] : memref<32x128xf32, #tpu.memory_space<vmem>> -> memref<1x128xf32, #tpu.memory_space<vmem>>
    %69 = tpu.memref_slice %arg5[%c9_i32_36] : memref<32x!tpu.dma_semaphore, #tpu.memory_space<semaphore_mem>> -> memref<1x!tpu.dma_semaphore, #tpu.memory_space<semaphore_mem>>
    %70 = tpu.memref_squeeze %69 : memref<1x!tpu.dma_semaphore, #tpu.memory_space<semaphore_mem>> -> memref<!tpu.dma_semaphore, #tpu.memory_space<semaphore_mem>>
    tpu.enqueue_dma source(%67 : memref<1x128xf32, #tpu.memory_space<any>>) target(%68 : memref<1x128xf32, #tpu.memory_space<vmem>>) target_semaphore(%70 : memref<!tpu.dma_semaphore, #tpu.memory_space<semaphore_mem>>)
    %c10_i32 = arith.constant 10 : i32
    %71 = arith.addi %0, %c10_i32 : i32
    %72 = arith.index_cast %71 : i32 to index
    %73 = memref.load %arg1[%72] : memref<32xi32, #tpu.memory_space<smem>>
    %c10_i32_40 = arith.constant 10 : i32
    %c0_i32_41 = arith.constant 0 : i32
    %74 = tpu.memref_slice %arg2[%73, %c0_i32_41] : memref<256x128xf32, #tpu.memory_space<any>> -> memref<1x128xf32, #tpu.memory_space<any>>
    %c10_i32_42 = arith.constant 10 : i32
    %c0_i32_43 = arith.constant 0 : i32
    %75 = tpu.memref_slice %arg4[%c10_i32_42, %c0_i32_43] : memref<32x128xf32, #tpu.memory_space<vmem>> -> memref<1x128xf32, #tpu.memory_space<vmem>>
    %76 = tpu.memref_slice %arg5[%c10_i32_40] : memref<32x!tpu.dma_semaphore, #tpu.memory_space<semaphore_mem>> -> memref<1x!tpu.dma_semaphore, #tpu.memory_space<semaphore_mem>>
    %77 = tpu.memref_squeeze %76 : memref<1x!tpu.dma_semaphore, #tpu.memory_space<semaphore_mem>> -> memref<!tpu.dma_semaphore, #tpu.memory_space<semaphore_mem>>
    tpu.enqueue_dma source(%74 : memref<1x128xf32, #tpu.memory_space<any>>) target(%75 : memref<1x128xf32, #tpu.memory_space<vmem>>) target_semaphore(%77 : memref<!tpu.dma_semaphore, #tpu.memory_space<semaphore_mem>>)
    %c11_i32 = arith.constant 11 : i32
    %78 = arith.addi %0, %c11_i32 : i32
    %79 = arith.index_cast %78 : i32 to index
    %80 = memref.load %arg1[%79] : memref<32xi32, #tpu.memory_space<smem>>
    %c11_i32_44 = arith.constant 11 : i32
    %c0_i32_45 = arith.constant 0 : i32
    %81 = tpu.memref_slice %arg2[%80, %c0_i32_45] : memref<256x128xf32, #tpu.memory_space<any>> -> memref<1x128xf32, #tpu.memory_space<any>>
    %c11_i32_46 = arith.constant 11 : i32
    %c0_i32_47 = arith.constant 0 : i32
    %82 = tpu.memref_slice %arg4[%c11_i32_46, %c0_i32_47] : memref<32x128xf32, #tpu.memory_space<vmem>> -> memref<1x128xf32, #tpu.memory_space<vmem>>
    %83 = tpu.memref_slice %arg5[%c11_i32_44] : memref<32x!tpu.dma_semaphore, #tpu.memory_space<semaphore_mem>> -> memref<1x!tpu.dma_semaphore, #tpu.memory_space<semaphore_mem>>
    %84 = tpu.memref_squeeze %83 : memref<1x!tpu.dma_semaphore, #tpu.memory_space<semaphore_mem>> -> memref<!tpu.dma_semaphore, #tpu.memory_space<semaphore_mem>>
    tpu.enqueue_dma source(%81 : memref<1x128xf32, #tpu.memory_space<any>>) target(%82 : memref<1x128xf32, #tpu.memory_space<vmem>>) target_semaphore(%84 : memref<!tpu.dma_semaphore, #tpu.memory_space<semaphore_mem>>)
    %c12_i32 = arith.constant 12 : i32
    %85 = arith.addi %0, %c12_i32 : i32
    %86 = arith.index_cast %85 : i32 to index
    %87 = memref.load %arg1[%86] : memref<32xi32, #tpu.memory_space<smem>>
    %c12_i32_48 = arith.constant 12 : i32
    %c0_i32_49 = arith.constant 0 : i32
    %88 = tpu.memref_slice %arg2[%87, %c0_i32_49] : memref<256x128xf32, #tpu.memory_space<any>> -> memref<1x128xf32, #tpu.memory_space<any>>
    %c12_i32_50 = arith.constant 12 : i32
    %c0_i32_51 = arith.constant 0 : i32
    %89 = tpu.memref_slice %arg4[%c12_i32_50, %c0_i32_51] : memref<32x128xf32, #tpu.memory_space<vmem>> -> memref<1x128xf32, #tpu.memory_space<vmem>>
    %90 = tpu.memref_slice %arg5[%c12_i32_48] : memref<32x!tpu.dma_semaphore, #tpu.memory_space<semaphore_mem>> -> memref<1x!tpu.dma_semaphore, #tpu.memory_space<semaphore_mem>>
    %91 = tpu.memref_squeeze %90 : memref<1x!tpu.dma_semaphore, #tpu.memory_space<semaphore_mem>> -> memref<!tpu.dma_semaphore, #tpu.memory_space<semaphore_mem>>
    tpu.enqueue_dma source(%88 : memref<1x128xf32, #tpu.memory_space<any>>) target(%89 : memref<1x128xf32, #tpu.memory_space<vmem>>) target_semaphore(%91 : memref<!tpu.dma_semaphore, #tpu.memory_space<semaphore_mem>>)
    %c13_i32 = arith.constant 13 : i32
    %92 = arith.addi %0, %c13_i32 : i32
    %93 = arith.index_cast %92 : i32 to index
    %94 = memref.load %arg1[%93] : memref<32xi32, #tpu.memory_space<smem>>
    %c13_i32_52 = arith.constant 13 : i32
    %c0_i32_53 = arith.constant 0 : i32
    %95 = tpu.memref_slice %arg2[%94, %c0_i32_53] : memref<256x128xf32, #tpu.memory_space<any>> -> memref<1x128xf32, #tpu.memory_space<any>>
    %c13_i32_54 = arith.constant 13 : i32
    %c0_i32_55 = arith.constant 0 : i32
    %96 = tpu.memref_slice %arg4[%c13_i32_54, %c0_i32_55] : memref<32x128xf32, #tpu.memory_space<vmem>> -> memref<1x128xf32, #tpu.memory_space<vmem>>
    %97 = tpu.memref_slice %arg5[%c13_i32_52] : memref<32x!tpu.dma_semaphore, #tpu.memory_space<semaphore_mem>> -> memref<1x!tpu.dma_semaphore, #tpu.memory_space<semaphore_mem>>
    %98 = tpu.memref_squeeze %97 : memref<1x!tpu.dma_semaphore, #tpu.memory_space<semaphore_mem>> -> memref<!tpu.dma_semaphore, #tpu.memory_space<semaphore_mem>>
    tpu.enqueue_dma source(%95 : memref<1x128xf32, #tpu.memory_space<any>>) target(%96 : memref<1x128xf32, #tpu.memory_space<vmem>>) target_semaphore(%98 : memref<!tpu.dma_semaphore, #tpu.memory_space<semaphore_mem>>)
    %c14_i32 = arith.constant 14 : i32
    %99 = arith.addi %0, %c14_i32 : i32
    %100 = arith.index_cast %99 : i32 to index
    %101 = memref.load %arg1[%100] : memref<32xi32, #tpu.memory_space<smem>>
    %c14_i32_56 = arith.constant 14 : i32
    %c0_i32_57 = arith.constant 0 : i32
    %102 = tpu.memref_slice %arg2[%101, %c0_i32_57] : memref<256x128xf32, #tpu.memory_space<any>> -> memref<1x128xf32, #tpu.memory_space<any>>
    %c14_i32_58 = arith.constant 14 : i32
    %c0_i32_59 = arith.constant 0 : i32
    %103 = tpu.memref_slice %arg4[%c14_i32_58, %c0_i32_59] : memref<32x128xf32, #tpu.memory_space<vmem>> -> memref<1x128xf32, #tpu.memory_space<vmem>>
    %104 = tpu.memref_slice %arg5[%c14_i32_56] : memref<32x!tpu.dma_semaphore, #tpu.memory_space<semaphore_mem>> -> memref<1x!tpu.dma_semaphore, #tpu.memory_space<semaphore_mem>>
    %105 = tpu.memref_squeeze %104 : memref<1x!tpu.dma_semaphore, #tpu.memory_space<semaphore_mem>> -> memref<!tpu.dma_semaphore, #tpu.memory_space<semaphore_mem>>
    tpu.enqueue_dma source(%102 : memref<1x128xf32, #tpu.memory_space<any>>) target(%103 : memref<1x128xf32, #tpu.memory_space<vmem>>) target_semaphore(%105 : memref<!tpu.dma_semaphore, #tpu.memory_space<semaphore_mem>>)
    %c15_i32 = arith.constant 15 : i32
    %106 = arith.addi %0, %c15_i32 : i32
    %107 = arith.index_cast %106 : i32 to index
    %108 = memref.load %arg1[%107] : memref<32xi32, #tpu.memory_space<smem>>
    %c15_i32_60 = arith.constant 15 : i32
    %c0_i32_61 = arith.constant 0 : i32
    %109 = tpu.memref_slice %arg2[%108, %c0_i32_61] : memref<256x128xf32, #tpu.memory_space<any>> -> memref<1x128xf32, #tpu.memory_space<any>>
    %c15_i32_62 = arith.constant 15 : i32
    %c0_i32_63 = arith.constant 0 : i32
    %110 = tpu.memref_slice %arg4[%c15_i32_62, %c0_i32_63] : memref<32x128xf32, #tpu.memory_space<vmem>> -> memref<1x128xf32, #tpu.memory_space<vmem>>
    %111 = tpu.memref_slice %arg5[%c15_i32_60] : memref<32x!tpu.dma_semaphore, #tpu.memory_space<semaphore_mem>> -> memref<1x!tpu.dma_semaphore, #tpu.memory_space<semaphore_mem>>
    %112 = tpu.memref_squeeze %111 : memref<1x!tpu.dma_semaphore, #tpu.memory_space<semaphore_mem>> -> memref<!tpu.dma_semaphore, #tpu.memory_space<semaphore_mem>>
    tpu.enqueue_dma source(%109 : memref<1x128xf32, #tpu.memory_space<any>>) target(%110 : memref<1x128xf32, #tpu.memory_space<vmem>>) target_semaphore(%112 : memref<!tpu.dma_semaphore, #tpu.memory_space<semaphore_mem>>)
    %c16_i32 = arith.constant 16 : i32
    %113 = arith.addi %0, %c16_i32 : i32
    %114 = arith.index_cast %113 : i32 to index
    %115 = memref.load %arg1[%114] : memref<32xi32, #tpu.memory_space<smem>>
    %c16_i32_64 = arith.constant 16 : i32
    %c0_i32_65 = arith.constant 0 : i32
    %116 = tpu.memref_slice %arg2[%115, %c0_i32_65] : memref<256x128xf32, #tpu.memory_space<any>> -> memref<1x128xf32, #tpu.memory_space<any>>
    %c16_i32_66 = arith.constant 16 : i32
    %c0_i32_67 = arith.constant 0 : i32
    %117 = tpu.memref_slice %arg4[%c16_i32_66, %c0_i32_67] : memref<32x128xf32, #tpu.memory_space<vmem>> -> memref<1x128xf32, #tpu.memory_space<vmem>>
    %118 = tpu.memref_slice %arg5[%c16_i32_64] : memref<32x!tpu.dma_semaphore, #tpu.memory_space<semaphore_mem>> -> memref<1x!tpu.dma_semaphore, #tpu.memory_space<semaphore_mem>>
    %119 = tpu.memref_squeeze %118 : memref<1x!tpu.dma_semaphore, #tpu.memory_space<semaphore_mem>> -> memref<!tpu.dma_semaphore, #tpu.memory_space<semaphore_mem>>
    tpu.enqueue_dma source(%116 : memref<1x128xf32, #tpu.memory_space<any>>) target(%117 : memref<1x128xf32, #tpu.memory_space<vmem>>) target_semaphore(%119 : memref<!tpu.dma_semaphore, #tpu.memory_space<semaphore_mem>>)
    %c17_i32 = arith.constant 17 : i32
    %120 = arith.addi %0, %c17_i32 : i32
    %121 = arith.index_cast %120 : i32 to index
    %122 = memref.load %arg1[%121] : memref<32xi32, #tpu.memory_space<smem>>
    %c17_i32_68 = arith.constant 17 : i32
    %c0_i32_69 = arith.constant 0 : i32
    %123 = tpu.memref_slice %arg2[%122, %c0_i32_69] : memref<256x128xf32, #tpu.memory_space<any>> -> memref<1x128xf32, #tpu.memory_space<any>>
    %c17_i32_70 = arith.constant 17 : i32
    %c0_i32_71 = arith.constant 0 : i32
    %124 = tpu.memref_slice %arg4[%c17_i32_70, %c0_i32_71] : memref<32x128xf32, #tpu.memory_space<vmem>> -> memref<1x128xf32, #tpu.memory_space<vmem>>
    %125 = tpu.memref_slice %arg5[%c17_i32_68] : memref<32x!tpu.dma_semaphore, #tpu.memory_space<semaphore_mem>> -> memref<1x!tpu.dma_semaphore, #tpu.memory_space<semaphore_mem>>
    %126 = tpu.memref_squeeze %125 : memref<1x!tpu.dma_semaphore, #tpu.memory_space<semaphore_mem>> -> memref<!tpu.dma_semaphore, #tpu.memory_space<semaphore_mem>>
    tpu.enqueue_dma source(%123 : memref<1x128xf32, #tpu.memory_space<any>>) target(%124 : memref<1x128xf32, #tpu.memory_space<vmem>>) target_semaphore(%126 : memref<!tpu.dma_semaphore, #tpu.memory_space<semaphore_mem>>)
    %c18_i32 = arith.constant 18 : i32
    %127 = arith.addi %0, %c18_i32 : i32
    %128 = arith.index_cast %127 : i32 to index
    %129 = memref.load %arg1[%128] : memref<32xi32, #tpu.memory_space<smem>>
    %c18_i32_72 = arith.constant 18 : i32
    %c0_i32_73 = arith.constant 0 : i32
    %130 = tpu.memref_slice %arg2[%129, %c0_i32_73] : memref<256x128xf32, #tpu.memory_space<any>> -> memref<1x128xf32, #tpu.memory_space<any>>
    %c18_i32_74 = arith.constant 18 : i32
    %c0_i32_75 = arith.constant 0 : i32
    %131 = tpu.memref_slice %arg4[%c18_i32_74, %c0_i32_75] : memref<32x128xf32, #tpu.memory_space<vmem>> -> memref<1x128xf32, #tpu.memory_space<vmem>>
    %132 = tpu.memref_slice %arg5[%c18_i32_72] : memref<32x!tpu.dma_semaphore, #tpu.memory_space<semaphore_mem>> -> memref<1x!tpu.dma_semaphore, #tpu.memory_space<semaphore_mem>>
    %133 = tpu.memref_squeeze %132 : memref<1x!tpu.dma_semaphore, #tpu.memory_space<semaphore_mem>> -> memref<!tpu.dma_semaphore, #tpu.memory_space<semaphore_mem>>
    tpu.enqueue_dma source(%130 : memref<1x128xf32, #tpu.memory_space<any>>) target(%131 : memref<1x128xf32, #tpu.memory_space<vmem>>) target_semaphore(%133 : memref<!tpu.dma_semaphore, #tpu.memory_space<semaphore_mem>>)
    %c19_i32 = arith.constant 19 : i32
    %134 = arith.addi %0, %c19_i32 : i32
    %135 = arith.index_cast %134 : i32 to index
    %136 = memref.load %arg1[%135] : memref<32xi32, #tpu.memory_space<smem>>
    %c19_i32_76 = arith.constant 19 : i32
    %c0_i32_77 = arith.constant 0 : i32
    %137 = tpu.memref_slice %arg2[%136, %c0_i32_77] : memref<256x128xf32, #tpu.memory_space<any>> -> memref<1x128xf32, #tpu.memory_space<any>>
    %c19_i32_78 = arith.constant 19 : i32
    %c0_i32_79 = arith.constant 0 : i32
    %138 = tpu.memref_slice %arg4[%c19_i32_78, %c0_i32_79] : memref<32x128xf32, #tpu.memory_space<vmem>> -> memref<1x128xf32, #tpu.memory_space<vmem>>
    %139 = tpu.memref_slice %arg5[%c19_i32_76] : memref<32x!tpu.dma_semaphore, #tpu.memory_space<semaphore_mem>> -> memref<1x!tpu.dma_semaphore, #tpu.memory_space<semaphore_mem>>
    %140 = tpu.memref_squeeze %139 : memref<1x!tpu.dma_semaphore, #tpu.memory_space<semaphore_mem>> -> memref<!tpu.dma_semaphore, #tpu.memory_space<semaphore_mem>>
    tpu.enqueue_dma source(%137 : memref<1x128xf32, #tpu.memory_space<any>>) target(%138 : memref<1x128xf32, #tpu.memory_space<vmem>>) target_semaphore(%140 : memref<!tpu.dma_semaphore, #tpu.memory_space<semaphore_mem>>)
    %c20_i32 = arith.constant 20 : i32
    %141 = arith.addi %0, %c20_i32 : i32
    %142 = arith.index_cast %141 : i32 to index
    %143 = memref.load %arg1[%142] : memref<32xi32, #tpu.memory_space<smem>>
    %c20_i32_80 = arith.constant 20 : i32
    %c0_i32_81 = arith.constant 0 : i32
    %144 = tpu.memref_slice %arg2[%143, %c0_i32_81] : memref<256x128xf32, #tpu.memory_space<any>> -> memref<1x128xf32, #tpu.memory_space<any>>
    %c20_i32_82 = arith.constant 20 : i32
    %c0_i32_83 = arith.constant 0 : i32
    %145 = tpu.memref_slice %arg4[%c20_i32_82, %c0_i32_83] : memref<32x128xf32, #tpu.memory_space<vmem>> -> memref<1x128xf32, #tpu.memory_space<vmem>>
    %146 = tpu.memref_slice %arg5[%c20_i32_80] : memref<32x!tpu.dma_semaphore, #tpu.memory_space<semaphore_mem>> -> memref<1x!tpu.dma_semaphore, #tpu.memory_space<semaphore_mem>>
    %147 = tpu.memref_squeeze %146 : memref<1x!tpu.dma_semaphore, #tpu.memory_space<semaphore_mem>> -> memref<!tpu.dma_semaphore, #tpu.memory_space<semaphore_mem>>
    tpu.enqueue_dma source(%144 : memref<1x128xf32, #tpu.memory_space<any>>) target(%145 : memref<1x128xf32, #tpu.memory_space<vmem>>) target_semaphore(%147 : memref<!tpu.dma_semaphore, #tpu.memory_space<semaphore_mem>>)
    %c21_i32 = arith.constant 21 : i32
    %148 = arith.addi %0, %c21_i32 : i32
    %149 = arith.index_cast %148 : i32 to index
    %150 = memref.load %arg1[%149] : memref<32xi32, #tpu.memory_space<smem>>
    %c21_i32_84 = arith.constant 21 : i32
    %c0_i32_85 = arith.constant 0 : i32
    %151 = tpu.memref_slice %arg2[%150, %c0_i32_85] : memref<256x128xf32, #tpu.memory_space<any>> -> memref<1x128xf32, #tpu.memory_space<any>>
    %c21_i32_86 = arith.constant 21 : i32
    %c0_i32_87 = arith.constant 0 : i32
    %152 = tpu.memref_slice %arg4[%c21_i32_86, %c0_i32_87] : memref<32x128xf32, #tpu.memory_space<vmem>> -> memref<1x128xf32, #tpu.memory_space<vmem>>
    %153 = tpu.memref_slice %arg5[%c21_i32_84] : memref<32x!tpu.dma_semaphore, #tpu.memory_space<semaphore_mem>> -> memref<1x!tpu.dma_semaphore, #tpu.memory_space<semaphore_mem>>
    %154 = tpu.memref_squeeze %153 : memref<1x!tpu.dma_semaphore, #tpu.memory_space<semaphore_mem>> -> memref<!tpu.dma_semaphore, #tpu.memory_space<semaphore_mem>>
    tpu.enqueue_dma source(%151 : memref<1x128xf32, #tpu.memory_space<any>>) target(%152 : memref<1x128xf32, #tpu.memory_space<vmem>>) target_semaphore(%154 : memref<!tpu.dma_semaphore, #tpu.memory_space<semaphore_mem>>)
    %c22_i32 = arith.constant 22 : i32
    %155 = arith.addi %0, %c22_i32 : i32
    %156 = arith.index_cast %155 : i32 to index
    %157 = memref.load %arg1[%156] : memref<32xi32, #tpu.memory_space<smem>>
    %c22_i32_88 = arith.constant 22 : i32
    %c0_i32_89 = arith.constant 0 : i32
    %158 = tpu.memref_slice %arg2[%157, %c0_i32_89] : memref<256x128xf32, #tpu.memory_space<any>> -> memref<1x128xf32, #tpu.memory_space<any>>
    %c22_i32_90 = arith.constant 22 : i32
    %c0_i32_91 = arith.constant 0 : i32
    %159 = tpu.memref_slice %arg4[%c22_i32_90, %c0_i32_91] : memref<32x128xf32, #tpu.memory_space<vmem>> -> memref<1x128xf32, #tpu.memory_space<vmem>>
    %160 = tpu.memref_slice %arg5[%c22_i32_88] : memref<32x!tpu.dma_semaphore, #tpu.memory_space<semaphore_mem>> -> memref<1x!tpu.dma_semaphore, #tpu.memory_space<semaphore_mem>>
    %161 = tpu.memref_squeeze %160 : memref<1x!tpu.dma_semaphore, #tpu.memory_space<semaphore_mem>> -> memref<!tpu.dma_semaphore, #tpu.memory_space<semaphore_mem>>
    tpu.enqueue_dma source(%158 : memref<1x128xf32, #tpu.memory_space<any>>) target(%159 : memref<1x128xf32, #tpu.memory_space<vmem>>) target_semaphore(%161 : memref<!tpu.dma_semaphore, #tpu.memory_space<semaphore_mem>>)
    %c23_i32 = arith.constant 23 : i32
    %162 = arith.addi %0, %c23_i32 : i32
    %163 = arith.index_cast %162 : i32 to index
    %164 = memref.load %arg1[%163] : memref<32xi32, #tpu.memory_space<smem>>
    %c23_i32_92 = arith.constant 23 : i32
    %c0_i32_93 = arith.constant 0 : i32
    %165 = tpu.memref_slice %arg2[%164, %c0_i32_93] : memref<256x128xf32, #tpu.memory_space<any>> -> memref<1x128xf32, #tpu.memory_space<any>>
    %c23_i32_94 = arith.constant 23 : i32
    %c0_i32_95 = arith.constant 0 : i32
    %166 = tpu.memref_slice %arg4[%c23_i32_94, %c0_i32_95] : memref<32x128xf32, #tpu.memory_space<vmem>> -> memref<1x128xf32, #tpu.memory_space<vmem>>
    %167 = tpu.memref_slice %arg5[%c23_i32_92] : memref<32x!tpu.dma_semaphore, #tpu.memory_space<semaphore_mem>> -> memref<1x!tpu.dma_semaphore, #tpu.memory_space<semaphore_mem>>
    %168 = tpu.memref_squeeze %167 : memref<1x!tpu.dma_semaphore, #tpu.memory_space<semaphore_mem>> -> memref<!tpu.dma_semaphore, #tpu.memory_space<semaphore_mem>>
    tpu.enqueue_dma source(%165 : memref<1x128xf32, #tpu.memory_space<any>>) target(%166 : memref<1x128xf32, #tpu.memory_space<vmem>>) target_semaphore(%168 : memref<!tpu.dma_semaphore, #tpu.memory_space<semaphore_mem>>)
    %c24_i32 = arith.constant 24 : i32
    %169 = arith.addi %0, %c24_i32 : i32
    %170 = arith.index_cast %169 : i32 to index
    %171 = memref.load %arg1[%170] : memref<32xi32, #tpu.memory_space<smem>>
    %c24_i32_96 = arith.constant 24 : i32
    %c0_i32_97 = arith.constant 0 : i32
    %172 = tpu.memref_slice %arg2[%171, %c0_i32_97] : memref<256x128xf32, #tpu.memory_space<any>> -> memref<1x128xf32, #tpu.memory_space<any>>
    %c24_i32_98 = arith.constant 24 : i32
    %c0_i32_99 = arith.constant 0 : i32
    %173 = tpu.memref_slice %arg4[%c24_i32_98, %c0_i32_99] : memref<32x128xf32, #tpu.memory_space<vmem>> -> memref<1x128xf32, #tpu.memory_space<vmem>>
    %174 = tpu.memref_slice %arg5[%c24_i32_96] : memref<32x!tpu.dma_semaphore, #tpu.memory_space<semaphore_mem>> -> memref<1x!tpu.dma_semaphore, #tpu.memory_space<semaphore_mem>>
    %175 = tpu.memref_squeeze %174 : memref<1x!tpu.dma_semaphore, #tpu.memory_space<semaphore_mem>> -> memref<!tpu.dma_semaphore, #tpu.memory_space<semaphore_mem>>
    tpu.enqueue_dma source(%172 : memref<1x128xf32, #tpu.memory_space<any>>) target(%173 : memref<1x128xf32, #tpu.memory_space<vmem>>) target_semaphore(%175 : memref<!tpu.dma_semaphore, #tpu.memory_space<semaphore_mem>>)
    %c25_i32 = arith.constant 25 : i32
    %176 = arith.addi %0, %c25_i32 : i32
    %177 = arith.index_cast %176 : i32 to index
    %178 = memref.load %arg1[%177] : memref<32xi32, #tpu.memory_space<smem>>
    %c25_i32_100 = arith.constant 25 : i32
    %c0_i32_101 = arith.constant 0 : i32
    %179 = tpu.memref_slice %arg2[%178, %c0_i32_101] : memref<256x128xf32, #tpu.memory_space<any>> -> memref<1x128xf32, #tpu.memory_space<any>>
    %c25_i32_102 = arith.constant 25 : i32
    %c0_i32_103 = arith.constant 0 : i32
    %180 = tpu.memref_slice %arg4[%c25_i32_102, %c0_i32_103] : memref<32x128xf32, #tpu.memory_space<vmem>> -> memref<1x128xf32, #tpu.memory_space<vmem>>
    %181 = tpu.memref_slice %arg5[%c25_i32_100] : memref<32x!tpu.dma_semaphore, #tpu.memory_space<semaphore_mem>> -> memref<1x!tpu.dma_semaphore, #tpu.memory_space<semaphore_mem>>
    %182 = tpu.memref_squeeze %181 : memref<1x!tpu.dma_semaphore, #tpu.memory_space<semaphore_mem>> -> memref<!tpu.dma_semaphore, #tpu.memory_space<semaphore_mem>>
    tpu.enqueue_dma source(%179 : memref<1x128xf32, #tpu.memory_space<any>>) target(%180 : memref<1x128xf32, #tpu.memory_space<vmem>>) target_semaphore(%182 : memref<!tpu.dma_semaphore, #tpu.memory_space<semaphore_mem>>)
    %c26_i32 = arith.constant 26 : i32
    %183 = arith.addi %0, %c26_i32 : i32
    %184 = arith.index_cast %183 : i32 to index
    %185 = memref.load %arg1[%184] : memref<32xi32, #tpu.memory_space<smem>>
    %c26_i32_104 = arith.constant 26 : i32
    %c0_i32_105 = arith.constant 0 : i32
    %186 = tpu.memref_slice %arg2[%185, %c0_i32_105] : memref<256x128xf32, #tpu.memory_space<any>> -> memref<1x128xf32, #tpu.memory_space<any>>
    %c26_i32_106 = arith.constant 26 : i32
    %c0_i32_107 = arith.constant 0 : i32
    %187 = tpu.memref_slice %arg4[%c26_i32_106, %c0_i32_107] : memref<32x128xf32, #tpu.memory_space<vmem>> -> memref<1x128xf32, #tpu.memory_space<vmem>>
    %188 = tpu.memref_slice %arg5[%c26_i32_104] : memref<32x!tpu.dma_semaphore, #tpu.memory_space<semaphore_mem>> -> memref<1x!tpu.dma_semaphore, #tpu.memory_space<semaphore_mem>>
    %189 = tpu.memref_squeeze %188 : memref<1x!tpu.dma_semaphore, #tpu.memory_space<semaphore_mem>> -> memref<!tpu.dma_semaphore, #tpu.memory_space<semaphore_mem>>
    tpu.enqueue_dma source(%186 : memref<1x128xf32, #tpu.memory_space<any>>) target(%187 : memref<1x128xf32, #tpu.memory_space<vmem>>) target_semaphore(%189 : memref<!tpu.dma_semaphore, #tpu.memory_space<semaphore_mem>>)
    %c27_i32 = arith.constant 27 : i32
    %190 = arith.addi %0, %c27_i32 : i32
    %191 = arith.index_cast %190 : i32 to index
    %192 = memref.load %arg1[%191] : memref<32xi32, #tpu.memory_space<smem>>
    %c27_i32_108 = arith.constant 27 : i32
    %c0_i32_109 = arith.constant 0 : i32
    %193 = tpu.memref_slice %arg2[%192, %c0_i32_109] : memref<256x128xf32, #tpu.memory_space<any>> -> memref<1x128xf32, #tpu.memory_space<any>>
    %c27_i32_110 = arith.constant 27 : i32
    %c0_i32_111 = arith.constant 0 : i32
    %194 = tpu.memref_slice %arg4[%c27_i32_110, %c0_i32_111] : memref<32x128xf32, #tpu.memory_space<vmem>> -> memref<1x128xf32, #tpu.memory_space<vmem>>
    %195 = tpu.memref_slice %arg5[%c27_i32_108] : memref<32x!tpu.dma_semaphore, #tpu.memory_space<semaphore_mem>> -> memref<1x!tpu.dma_semaphore, #tpu.memory_space<semaphore_mem>>
    %196 = tpu.memref_squeeze %195 : memref<1x!tpu.dma_semaphore, #tpu.memory_space<semaphore_mem>> -> memref<!tpu.dma_semaphore, #tpu.memory_space<semaphore_mem>>
    tpu.enqueue_dma source(%193 : memref<1x128xf32, #tpu.memory_space<any>>) target(%194 : memref<1x128xf32, #tpu.memory_space<vmem>>) target_semaphore(%196 : memref<!tpu.dma_semaphore, #tpu.memory_space<semaphore_mem>>)
    %c28_i32 = arith.constant 28 : i32
    %197 = arith.addi %0, %c28_i32 : i32
    %198 = arith.index_cast %197 : i32 to index
    %199 = memref.load %arg1[%198] : memref<32xi32, #tpu.memory_space<smem>>
    %c28_i32_112 = arith.constant 28 : i32
    %c0_i32_113 = arith.constant 0 : i32
    %200 = tpu.memref_slice %arg2[%199, %c0_i32_113] : memref<256x128xf32, #tpu.memory_space<any>> -> memref<1x128xf32, #tpu.memory_space<any>>
    %c28_i32_114 = arith.constant 28 : i32
    %c0_i32_115 = arith.constant 0 : i32
    %201 = tpu.memref_slice %arg4[%c28_i32_114, %c0_i32_115] : memref<32x128xf32, #tpu.memory_space<vmem>> -> memref<1x128xf32, #tpu.memory_space<vmem>>
    %202 = tpu.memref_slice %arg5[%c28_i32_112] : memref<32x!tpu.dma_semaphore, #tpu.memory_space<semaphore_mem>> -> memref<1x!tpu.dma_semaphore, #tpu.memory_space<semaphore_mem>>
    %203 = tpu.memref_squeeze %202 : memref<1x!tpu.dma_semaphore, #tpu.memory_space<semaphore_mem>> -> memref<!tpu.dma_semaphore, #tpu.memory_space<semaphore_mem>>
    tpu.enqueue_dma source(%200 : memref<1x128xf32, #tpu.memory_space<any>>) target(%201 : memref<1x128xf32, #tpu.memory_space<vmem>>) target_semaphore(%203 : memref<!tpu.dma_semaphore, #tpu.memory_space<semaphore_mem>>)
    %c29_i32 = arith.constant 29 : i32
    %204 = arith.addi %0, %c29_i32 : i32
    %205 = arith.index_cast %204 : i32 to index
    %206 = memref.load %arg1[%205] : memref<32xi32, #tpu.memory_space<smem>>
    %c29_i32_116 = arith.constant 29 : i32
    %c0_i32_117 = arith.constant 0 : i32
    %207 = tpu.memref_slice %arg2[%206, %c0_i32_117] : memref<256x128xf32, #tpu.memory_space<any>> -> memref<1x128xf32, #tpu.memory_space<any>>
    %c29_i32_118 = arith.constant 29 : i32
    %c0_i32_119 = arith.constant 0 : i32
    %208 = tpu.memref_slice %arg4[%c29_i32_118, %c0_i32_119] : memref<32x128xf32, #tpu.memory_space<vmem>> -> memref<1x128xf32, #tpu.memory_space<vmem>>
    %209 = tpu.memref_slice %arg5[%c29_i32_116] : memref<32x!tpu.dma_semaphore, #tpu.memory_space<semaphore_mem>> -> memref<1x!tpu.dma_semaphore, #tpu.memory_space<semaphore_mem>>
    %210 = tpu.memref_squeeze %209 : memref<1x!tpu.dma_semaphore, #tpu.memory_space<semaphore_mem>> -> memref<!tpu.dma_semaphore, #tpu.memory_space<semaphore_mem>>
    tpu.enqueue_dma source(%207 : memref<1x128xf32, #tpu.memory_space<any>>) target(%208 : memref<1x128xf32, #tpu.memory_space<vmem>>) target_semaphore(%210 : memref<!tpu.dma_semaphore, #tpu.memory_space<semaphore_mem>>)
    %c30_i32 = arith.constant 30 : i32
    %211 = arith.addi %0, %c30_i32 : i32
    %212 = arith.index_cast %211 : i32 to index
    %213 = memref.load %arg1[%212] : memref<32xi32, #tpu.memory_space<smem>>
    %c30_i32_120 = arith.constant 30 : i32
    %c0_i32_121 = arith.constant 0 : i32
    %214 = tpu.memref_slice %arg2[%213, %c0_i32_121] : memref<256x128xf32, #tpu.memory_space<any>> -> memref<1x128xf32, #tpu.memory_space<any>>
    %c30_i32_122 = arith.constant 30 : i32
    %c0_i32_123 = arith.constant 0 : i32
    %215 = tpu.memref_slice %arg4[%c30_i32_122, %c0_i32_123] : memref<32x128xf32, #tpu.memory_space<vmem>> -> memref<1x128xf32, #tpu.memory_space<vmem>>
    %216 = tpu.memref_slice %arg5[%c30_i32_120] : memref<32x!tpu.dma_semaphore, #tpu.memory_space<semaphore_mem>> -> memref<1x!tpu.dma_semaphore, #tpu.memory_space<semaphore_mem>>
    %217 = tpu.memref_squeeze %216 : memref<1x!tpu.dma_semaphore, #tpu.memory_space<semaphore_mem>> -> memref<!tpu.dma_semaphore, #tpu.memory_space<semaphore_mem>>
    tpu.enqueue_dma source(%214 : memref<1x128xf32, #tpu.memory_space<any>>) target(%215 : memref<1x128xf32, #tpu.memory_space<vmem>>) target_semaphore(%217 : memref<!tpu.dma_semaphore, #tpu.memory_space<semaphore_mem>>)
    %c31_i32 = arith.constant 31 : i32
    %218 = arith.addi %0, %c31_i32 : i32
    %219 = arith.index_cast %218 : i32 to index
    %220 = memref.load %arg1[%219] : memref<32xi32, #tpu.memory_space<smem>>
    %c31_i32_124 = arith.constant 31 : i32
    %c0_i32_125 = arith.constant 0 : i32
    %221 = tpu.memref_slice %arg2[%220, %c0_i32_125] : memref<256x128xf32, #tpu.memory_space<any>> -> memref<1x128xf32, #tpu.memory_space<any>>
    %c31_i32_126 = arith.constant 31 : i32
    %c0_i32_127 = arith.constant 0 : i32
    %222 = tpu.memref_slice %arg4[%c31_i32_126, %c0_i32_127] : memref<32x128xf32, #tpu.memory_space<vmem>> -> memref<1x128xf32, #tpu.memory_space<vmem>>
    %223 = tpu.memref_slice %arg5[%c31_i32_124] : memref<32x!tpu.dma_semaphore, #tpu.memory_space<semaphore_mem>> -> memref<1x!tpu.dma_semaphore, #tpu.memory_space<semaphore_mem>>
    %224 = tpu.memref_squeeze %223 : memref<1x!tpu.dma_semaphore, #tpu.memory_space<semaphore_mem>> -> memref<!tpu.dma_semaphore, #tpu.memory_space<semaphore_mem>>
    tpu.enqueue_dma source(%221 : memref<1x128xf32, #tpu.memory_space<any>>) target(%222 : memref<1x128xf32, #tpu.memory_space<vmem>>) target_semaphore(%224 : memref<!tpu.dma_semaphore, #tpu.memory_space<semaphore_mem>>)
    %c0_i32_128 = arith.constant 0 : i32
    %225 = arith.addi %0, %c0_i32_128 : i32
    %226 = arith.index_cast %225 : i32 to index
    %227 = memref.load %arg1[%226] : memref<32xi32, #tpu.memory_space<smem>>
    %c0_i32_129 = arith.constant 0 : i32
    %c0_i32_130 = arith.constant 0 : i32
    %228 = tpu.memref_slice %arg2[%227, %c0_i32_130] : memref<256x128xf32, #tpu.memory_space<any>> -> memref<1x128xf32, #tpu.memory_space<any>>
    %c0_i32_131 = arith.constant 0 : i32
    %c0_i32_132 = arith.constant 0 : i32
    %229 = tpu.memref_slice %arg4[%c0_i32_131, %c0_i32_132] : memref<32x128xf32, #tpu.memory_space<vmem>> -> memref<1x128xf32, #tpu.memory_space<vmem>>
    %230 = tpu.memref_slice %arg5[%c0_i32_129] : memref<32x!tpu.dma_semaphore, #tpu.memory_space<semaphore_mem>> -> memref<1x!tpu.dma_semaphore, #tpu.memory_space<semaphore_mem>>
    %231 = tpu.memref_squeeze %230 : memref<1x!tpu.dma_semaphore, #tpu.memory_space<semaphore_mem>> -> memref<!tpu.dma_semaphore, #tpu.memory_space<semaphore_mem>>
    tpu.wait_dma2 semaphore(%231 : memref<!tpu.dma_semaphore, #tpu.memory_space<semaphore_mem>>) src(%228 : memref<1x128xf32, #tpu.memory_space<any>>) dst(%229 : memref<1x128xf32, #tpu.memory_space<vmem>>)
    %c1_i32_133 = arith.constant 1 : i32
    %232 = arith.addi %0, %c1_i32_133 : i32
    %233 = arith.index_cast %232 : i32 to index
    %234 = memref.load %arg1[%233] : memref<32xi32, #tpu.memory_space<smem>>
    %c1_i32_134 = arith.constant 1 : i32
    %c0_i32_135 = arith.constant 0 : i32
    %235 = tpu.memref_slice %arg2[%234, %c0_i32_135] : memref<256x128xf32, #tpu.memory_space<any>> -> memref<1x128xf32, #tpu.memory_space<any>>
    %c1_i32_136 = arith.constant 1 : i32
    %c0_i32_137 = arith.constant 0 : i32
    %236 = tpu.memref_slice %arg4[%c1_i32_136, %c0_i32_137] : memref<32x128xf32, #tpu.memory_space<vmem>> -> memref<1x128xf32, #tpu.memory_space<vmem>>
    %237 = tpu.memref_slice %arg5[%c1_i32_134] : memref<32x!tpu.dma_semaphore, #tpu.memory_space<semaphore_mem>> -> memref<1x!tpu.dma_semaphore, #tpu.memory_space<semaphore_mem>>
    %238 = tpu.memref_squeeze %237 : memref<1x!tpu.dma_semaphore, #tpu.memory_space<semaphore_mem>> -> memref<!tpu.dma_semaphore, #tpu.memory_space<semaphore_mem>>
    tpu.wait_dma2 semaphore(%238 : memref<!tpu.dma_semaphore, #tpu.memory_space<semaphore_mem>>) src(%235 : memref<1x128xf32, #tpu.memory_space<any>>) dst(%236 : memref<1x128xf32, #tpu.memory_space<vmem>>)
    %c2_i32_138 = arith.constant 2 : i32
    %239 = arith.addi %0, %c2_i32_138 : i32
    %240 = arith.index_cast %239 : i32 to index
    %241 = memref.load %arg1[%240] : memref<32xi32, #tpu.memory_space<smem>>
    %c2_i32_139 = arith.constant 2 : i32
    %c0_i32_140 = arith.constant 0 : i32
    %242 = tpu.memref_slice %arg2[%241, %c0_i32_140] : memref<256x128xf32, #tpu.memory_space<any>> -> memref<1x128xf32, #tpu.memory_space<any>>
    %c2_i32_141 = arith.constant 2 : i32
    %c0_i32_142 = arith.constant 0 : i32
    %243 = tpu.memref_slice %arg4[%c2_i32_141, %c0_i32_142] : memref<32x128xf32, #tpu.memory_space<vmem>> -> memref<1x128xf32, #tpu.memory_space<vmem>>
    %244 = tpu.memref_slice %arg5[%c2_i32_139] : memref<32x!tpu.dma_semaphore, #tpu.memory_space<semaphore_mem>> -> memref<1x!tpu.dma_semaphore, #tpu.memory_space<semaphore_mem>>
    %245 = tpu.memref_squeeze %244 : memref<1x!tpu.dma_semaphore, #tpu.memory_space<semaphore_mem>> -> memref<!tpu.dma_semaphore, #tpu.memory_space<semaphore_mem>>
    tpu.wait_dma2 semaphore(%245 : memref<!tpu.dma_semaphore, #tpu.memory_space<semaphore_mem>>) src(%242 : memref<1x128xf32, #tpu.memory_space<any>>) dst(%243 : memref<1x128xf32, #tpu.memory_space<vmem>>)
    %c3_i32_143 = arith.constant 3 : i32
    %246 = arith.addi %0, %c3_i32_143 : i32
    %247 = arith.index_cast %246 : i32 to index
    %248 = memref.load %arg1[%247] : memref<32xi32, #tpu.memory_space<smem>>
    %c3_i32_144 = arith.constant 3 : i32
    %c0_i32_145 = arith.constant 0 : i32
    %249 = tpu.memref_slice %arg2[%248, %c0_i32_145] : memref<256x128xf32, #tpu.memory_space<any>> -> memref<1x128xf32, #tpu.memory_space<any>>
    %c3_i32_146 = arith.constant 3 : i32
    %c0_i32_147 = arith.constant 0 : i32
    %250 = tpu.memref_slice %arg4[%c3_i32_146, %c0_i32_147] : memref<32x128xf32, #tpu.memory_space<vmem>> -> memref<1x128xf32, #tpu.memory_space<vmem>>
    %251 = tpu.memref_slice %arg5[%c3_i32_144] : memref<32x!tpu.dma_semaphore, #tpu.memory_space<semaphore_mem>> -> memref<1x!tpu.dma_semaphore, #tpu.memory_space<semaphore_mem>>
    %252 = tpu.memref_squeeze %251 : memref<1x!tpu.dma_semaphore, #tpu.memory_space<semaphore_mem>> -> memref<!tpu.dma_semaphore, #tpu.memory_space<semaphore_mem>>
    tpu.wait_dma2 semaphore(%252 : memref<!tpu.dma_semaphore, #tpu.memory_space<semaphore_mem>>) src(%249 : memref<1x128xf32, #tpu.memory_space<any>>) dst(%250 : memref<1x128xf32, #tpu.memory_space<vmem>>)
    %c4_i32_148 = arith.constant 4 : i32
    %253 = arith.addi %0, %c4_i32_148 : i32
    %254 = arith.index_cast %253 : i32 to index
    %255 = memref.load %arg1[%254] : memref<32xi32, #tpu.memory_space<smem>>
    %c4_i32_149 = arith.constant 4 : i32
    %c0_i32_150 = arith.constant 0 : i32
    %256 = tpu.memref_slice %arg2[%255, %c0_i32_150] : memref<256x128xf32, #tpu.memory_space<any>> -> memref<1x128xf32, #tpu.memory_space<any>>
    %c4_i32_151 = arith.constant 4 : i32
    %c0_i32_152 = arith.constant 0 : i32
    %257 = tpu.memref_slice %arg4[%c4_i32_151, %c0_i32_152] : memref<32x128xf32, #tpu.memory_space<vmem>> -> memref<1x128xf32, #tpu.memory_space<vmem>>
    %258 = tpu.memref_slice %arg5[%c4_i32_149] : memref<32x!tpu.dma_semaphore, #tpu.memory_space<semaphore_mem>> -> memref<1x!tpu.dma_semaphore, #tpu.memory_space<semaphore_mem>>
    %259 = tpu.memref_squeeze %258 : memref<1x!tpu.dma_semaphore, #tpu.memory_space<semaphore_mem>> -> memref<!tpu.dma_semaphore, #tpu.memory_space<semaphore_mem>>
    tpu.wait_dma2 semaphore(%259 : memref<!tpu.dma_semaphore, #tpu.memory_space<semaphore_mem>>) src(%256 : memref<1x128xf32, #tpu.memory_space<any>>) dst(%257 : memref<1x128xf32, #tpu.memory_space<vmem>>)
    %c5_i32_153 = arith.constant 5 : i32
    %260 = arith.addi %0, %c5_i32_153 : i32
    %261 = arith.index_cast %260 : i32 to index
    %262 = memref.load %arg1[%261] : memref<32xi32, #tpu.memory_space<smem>>
    %c5_i32_154 = arith.constant 5 : i32
    %c0_i32_155 = arith.constant 0 : i32
    %263 = tpu.memref_slice %arg2[%262, %c0_i32_155] : memref<256x128xf32, #tpu.memory_space<any>> -> memref<1x128xf32, #tpu.memory_space<any>>
    %c5_i32_156 = arith.constant 5 : i32
    %c0_i32_157 = arith.constant 0 : i32
    %264 = tpu.memref_slice %arg4[%c5_i32_156, %c0_i32_157] : memref<32x128xf32, #tpu.memory_space<vmem>> -> memref<1x128xf32, #tpu.memory_space<vmem>>
    %265 = tpu.memref_slice %arg5[%c5_i32_154] : memref<32x!tpu.dma_semaphore, #tpu.memory_space<semaphore_mem>> -> memref<1x!tpu.dma_semaphore, #tpu.memory_space<semaphore_mem>>
    %266 = tpu.memref_squeeze %265 : memref<1x!tpu.dma_semaphore, #tpu.memory_space<semaphore_mem>> -> memref<!tpu.dma_semaphore, #tpu.memory_space<semaphore_mem>>
    tpu.wait_dma2 semaphore(%266 : memref<!tpu.dma_semaphore, #tpu.memory_space<semaphore_mem>>) src(%263 : memref<1x128xf32, #tpu.memory_space<any>>) dst(%264 : memref<1x128xf32, #tpu.memory_space<vmem>>)
    %c6_i32_158 = arith.constant 6 : i32
    %267 = arith.addi %0, %c6_i32_158 : i32
    %268 = arith.index_cast %267 : i32 to index
    %269 = memref.load %arg1[%268] : memref<32xi32, #tpu.memory_space<smem>>
    %c6_i32_159 = arith.constant 6 : i32
    %c0_i32_160 = arith.constant 0 : i32
    %270 = tpu.memref_slice %arg2[%269, %c0_i32_160] : memref<256x128xf32, #tpu.memory_space<any>> -> memref<1x128xf32, #tpu.memory_space<any>>
    %c6_i32_161 = arith.constant 6 : i32
    %c0_i32_162 = arith.constant 0 : i32
    %271 = tpu.memref_slice %arg4[%c6_i32_161, %c0_i32_162] : memref<32x128xf32, #tpu.memory_space<vmem>> -> memref<1x128xf32, #tpu.memory_space<vmem>>
    %272 = tpu.memref_slice %arg5[%c6_i32_159] : memref<32x!tpu.dma_semaphore, #tpu.memory_space<semaphore_mem>> -> memref<1x!tpu.dma_semaphore, #tpu.memory_space<semaphore_mem>>
    %273 = tpu.memref_squeeze %272 : memref<1x!tpu.dma_semaphore, #tpu.memory_space<semaphore_mem>> -> memref<!tpu.dma_semaphore, #tpu.memory_space<semaphore_mem>>
    tpu.wait_dma2 semaphore(%273 : memref<!tpu.dma_semaphore, #tpu.memory_space<semaphore_mem>>) src(%270 : memref<1x128xf32, #tpu.memory_space<any>>) dst(%271 : memref<1x128xf32, #tpu.memory_space<vmem>>)
    %c7_i32_163 = arith.constant 7 : i32
    %274 = arith.addi %0, %c7_i32_163 : i32
    %275 = arith.index_cast %274 : i32 to index
    %276 = memref.load %arg1[%275] : memref<32xi32, #tpu.memory_space<smem>>
    %c7_i32_164 = arith.constant 7 : i32
    %c0_i32_165 = arith.constant 0 : i32
    %277 = tpu.memref_slice %arg2[%276, %c0_i32_165] : memref<256x128xf32, #tpu.memory_space<any>> -> memref<1x128xf32, #tpu.memory_space<any>>
    %c7_i32_166 = arith.constant 7 : i32
    %c0_i32_167 = arith.constant 0 : i32
    %278 = tpu.memref_slice %arg4[%c7_i32_166, %c0_i32_167] : memref<32x128xf32, #tpu.memory_space<vmem>> -> memref<1x128xf32, #tpu.memory_space<vmem>>
    %279 = tpu.memref_slice %arg5[%c7_i32_164] : memref<32x!tpu.dma_semaphore, #tpu.memory_space<semaphore_mem>> -> memref<1x!tpu.dma_semaphore, #tpu.memory_space<semaphore_mem>>
    %280 = tpu.memref_squeeze %279 : memref<1x!tpu.dma_semaphore, #tpu.memory_space<semaphore_mem>> -> memref<!tpu.dma_semaphore, #tpu.memory_space<semaphore_mem>>
    tpu.wait_dma2 semaphore(%280 : memref<!tpu.dma_semaphore, #tpu.memory_space<semaphore_mem>>) src(%277 : memref<1x128xf32, #tpu.memory_space<any>>) dst(%278 : memref<1x128xf32, #tpu.memory_space<vmem>>)
    %c8_i32_168 = arith.constant 8 : i32
    %281 = arith.addi %0, %c8_i32_168 : i32
    %282 = arith.index_cast %281 : i32 to index
    %283 = memref.load %arg1[%282] : memref<32xi32, #tpu.memory_space<smem>>
    %c8_i32_169 = arith.constant 8 : i32
    %c0_i32_170 = arith.constant 0 : i32
    %284 = tpu.memref_slice %arg2[%283, %c0_i32_170] : memref<256x128xf32, #tpu.memory_space<any>> -> memref<1x128xf32, #tpu.memory_space<any>>
    %c8_i32_171 = arith.constant 8 : i32
    %c0_i32_172 = arith.constant 0 : i32
    %285 = tpu.memref_slice %arg4[%c8_i32_171, %c0_i32_172] : memref<32x128xf32, #tpu.memory_space<vmem>> -> memref<1x128xf32, #tpu.memory_space<vmem>>
    %286 = tpu.memref_slice %arg5[%c8_i32_169] : memref<32x!tpu.dma_semaphore, #tpu.memory_space<semaphore_mem>> -> memref<1x!tpu.dma_semaphore, #tpu.memory_space<semaphore_mem>>
    %287 = tpu.memref_squeeze %286 : memref<1x!tpu.dma_semaphore, #tpu.memory_space<semaphore_mem>> -> memref<!tpu.dma_semaphore, #tpu.memory_space<semaphore_mem>>
    tpu.wait_dma2 semaphore(%287 : memref<!tpu.dma_semaphore, #tpu.memory_space<semaphore_mem>>) src(%284 : memref<1x128xf32, #tpu.memory_space<any>>) dst(%285 : memref<1x128xf32, #tpu.memory_space<vmem>>)
    %c9_i32_173 = arith.constant 9 : i32
    %288 = arith.addi %0, %c9_i32_173 : i32
    %289 = arith.index_cast %288 : i32 to index
    %290 = memref.load %arg1[%289] : memref<32xi32, #tpu.memory_space<smem>>
    %c9_i32_174 = arith.constant 9 : i32
    %c0_i32_175 = arith.constant 0 : i32
    %291 = tpu.memref_slice %arg2[%290, %c0_i32_175] : memref<256x128xf32, #tpu.memory_space<any>> -> memref<1x128xf32, #tpu.memory_space<any>>
    %c9_i32_176 = arith.constant 9 : i32
    %c0_i32_177 = arith.constant 0 : i32
    %292 = tpu.memref_slice %arg4[%c9_i32_176, %c0_i32_177] : memref<32x128xf32, #tpu.memory_space<vmem>> -> memref<1x128xf32, #tpu.memory_space<vmem>>
    %293 = tpu.memref_slice %arg5[%c9_i32_174] : memref<32x!tpu.dma_semaphore, #tpu.memory_space<semaphore_mem>> -> memref<1x!tpu.dma_semaphore, #tpu.memory_space<semaphore_mem>>
    %294 = tpu.memref_squeeze %293 : memref<1x!tpu.dma_semaphore, #tpu.memory_space<semaphore_mem>> -> memref<!tpu.dma_semaphore, #tpu.memory_space<semaphore_mem>>
    tpu.wait_dma2 semaphore(%294 : memref<!tpu.dma_semaphore, #tpu.memory_space<semaphore_mem>>) src(%291 : memref<1x128xf32, #tpu.memory_space<any>>) dst(%292 : memref<1x128xf32, #tpu.memory_space<vmem>>)
    %c10_i32_178 = arith.constant 10 : i32
    %295 = arith.addi %0, %c10_i32_178 : i32
    %296 = arith.index_cast %295 : i32 to index
    %297 = memref.load %arg1[%296] : memref<32xi32, #tpu.memory_space<smem>>
    %c10_i32_179 = arith.constant 10 : i32
    %c0_i32_180 = arith.constant 0 : i32
    %298 = tpu.memref_slice %arg2[%297, %c0_i32_180] : memref<256x128xf32, #tpu.memory_space<any>> -> memref<1x128xf32, #tpu.memory_space<any>>
    %c10_i32_181 = arith.constant 10 : i32
    %c0_i32_182 = arith.constant 0 : i32
    %299 = tpu.memref_slice %arg4[%c10_i32_181, %c0_i32_182] : memref<32x128xf32, #tpu.memory_space<vmem>> -> memref<1x128xf32, #tpu.memory_space<vmem>>
    %300 = tpu.memref_slice %arg5[%c10_i32_179] : memref<32x!tpu.dma_semaphore, #tpu.memory_space<semaphore_mem>> -> memref<1x!tpu.dma_semaphore, #tpu.memory_space<semaphore_mem>>
    %301 = tpu.memref_squeeze %300 : memref<1x!tpu.dma_semaphore, #tpu.memory_space<semaphore_mem>> -> memref<!tpu.dma_semaphore, #tpu.memory_space<semaphore_mem>>
    tpu.wait_dma2 semaphore(%301 : memref<!tpu.dma_semaphore, #tpu.memory_space<semaphore_mem>>) src(%298 : memref<1x128xf32, #tpu.memory_space<any>>) dst(%299 : memref<1x128xf32, #tpu.memory_space<vmem>>)
    %c11_i32_183 = arith.constant 11 : i32
    %302 = arith.addi %0, %c11_i32_183 : i32
    %303 = arith.index_cast %302 : i32 to index
    %304 = memref.load %arg1[%303] : memref<32xi32, #tpu.memory_space<smem>>
    %c11_i32_184 = arith.constant 11 : i32
    %c0_i32_185 = arith.constant 0 : i32
    %305 = tpu.memref_slice %arg2[%304, %c0_i32_185] : memref<256x128xf32, #tpu.memory_space<any>> -> memref<1x128xf32, #tpu.memory_space<any>>
    %c11_i32_186 = arith.constant 11 : i32
    %c0_i32_187 = arith.constant 0 : i32
    %306 = tpu.memref_slice %arg4[%c11_i32_186, %c0_i32_187] : memref<32x128xf32, #tpu.memory_space<vmem>> -> memref<1x128xf32, #tpu.memory_space<vmem>>
    %307 = tpu.memref_slice %arg5[%c11_i32_184] : memref<32x!tpu.dma_semaphore, #tpu.memory_space<semaphore_mem>> -> memref<1x!tpu.dma_semaphore, #tpu.memory_space<semaphore_mem>>
    %308 = tpu.memref_squeeze %307 : memref<1x!tpu.dma_semaphore, #tpu.memory_space<semaphore_mem>> -> memref<!tpu.dma_semaphore, #tpu.memory_space<semaphore_mem>>
    tpu.wait_dma2 semaphore(%308 : memref<!tpu.dma_semaphore, #tpu.memory_space<semaphore_mem>>) src(%305 : memref<1x128xf32, #tpu.memory_space<any>>) dst(%306 : memref<1x128xf32, #tpu.memory_space<vmem>>)
    %c12_i32_188 = arith.constant 12 : i32
    %309 = arith.addi %0, %c12_i32_188 : i32
    %310 = arith.index_cast %309 : i32 to index
    %311 = memref.load %arg1[%310] : memref<32xi32, #tpu.memory_space<smem>>
    %c12_i32_189 = arith.constant 12 : i32
    %c0_i32_190 = arith.constant 0 : i32
    %312 = tpu.memref_slice %arg2[%311, %c0_i32_190] : memref<256x128xf32, #tpu.memory_space<any>> -> memref<1x128xf32, #tpu.memory_space<any>>
    %c12_i32_191 = arith.constant 12 : i32
    %c0_i32_192 = arith.constant 0 : i32
    %313 = tpu.memref_slice %arg4[%c12_i32_191, %c0_i32_192] : memref<32x128xf32, #tpu.memory_space<vmem>> -> memref<1x128xf32, #tpu.memory_space<vmem>>
    %314 = tpu.memref_slice %arg5[%c12_i32_189] : memref<32x!tpu.dma_semaphore, #tpu.memory_space<semaphore_mem>> -> memref<1x!tpu.dma_semaphore, #tpu.memory_space<semaphore_mem>>
    %315 = tpu.memref_squeeze %314 : memref<1x!tpu.dma_semaphore, #tpu.memory_space<semaphore_mem>> -> memref<!tpu.dma_semaphore, #tpu.memory_space<semaphore_mem>>
    tpu.wait_dma2 semaphore(%315 : memref<!tpu.dma_semaphore, #tpu.memory_space<semaphore_mem>>) src(%312 : memref<1x128xf32, #tpu.memory_space<any>>) dst(%313 : memref<1x128xf32, #tpu.memory_space<vmem>>)
    %c13_i32_193 = arith.constant 13 : i32
    %316 = arith.addi %0, %c13_i32_193 : i32
    %317 = arith.index_cast %316 : i32 to index
    %318 = memref.load %arg1[%317] : memref<32xi32, #tpu.memory_space<smem>>
    %c13_i32_194 = arith.constant 13 : i32
    %c0_i32_195 = arith.constant 0 : i32
    %319 = tpu.memref_slice %arg2[%318, %c0_i32_195] : memref<256x128xf32, #tpu.memory_space<any>> -> memref<1x128xf32, #tpu.memory_space<any>>
    %c13_i32_196 = arith.constant 13 : i32
    %c0_i32_197 = arith.constant 0 : i32
    %320 = tpu.memref_slice %arg4[%c13_i32_196, %c0_i32_197] : memref<32x128xf32, #tpu.memory_space<vmem>> -> memref<1x128xf32, #tpu.memory_space<vmem>>
    %321 = tpu.memref_slice %arg5[%c13_i32_194] : memref<32x!tpu.dma_semaphore, #tpu.memory_space<semaphore_mem>> -> memref<1x!tpu.dma_semaphore, #tpu.memory_space<semaphore_mem>>
    %322 = tpu.memref_squeeze %321 : memref<1x!tpu.dma_semaphore, #tpu.memory_space<semaphore_mem>> -> memref<!tpu.dma_semaphore, #tpu.memory_space<semaphore_mem>>
    tpu.wait_dma2 semaphore(%322 : memref<!tpu.dma_semaphore, #tpu.memory_space<semaphore_mem>>) src(%319 : memref<1x128xf32, #tpu.memory_space<any>>) dst(%320 : memref<1x128xf32, #tpu.memory_space<vmem>>)
    %c14_i32_198 = arith.constant 14 : i32
    %323 = arith.addi %0, %c14_i32_198 : i32
    %324 = arith.index_cast %323 : i32 to index
    %325 = memref.load %arg1[%324] : memref<32xi32, #tpu.memory_space<smem>>
    %c14_i32_199 = arith.constant 14 : i32
    %c0_i32_200 = arith.constant 0 : i32
    %326 = tpu.memref_slice %arg2[%325, %c0_i32_200] : memref<256x128xf32, #tpu.memory_space<any>> -> memref<1x128xf32, #tpu.memory_space<any>>
    %c14_i32_201 = arith.constant 14 : i32
    %c0_i32_202 = arith.constant 0 : i32
    %327 = tpu.memref_slice %arg4[%c14_i32_201, %c0_i32_202] : memref<32x128xf32, #tpu.memory_space<vmem>> -> memref<1x128xf32, #tpu.memory_space<vmem>>
    %328 = tpu.memref_slice %arg5[%c14_i32_199] : memref<32x!tpu.dma_semaphore, #tpu.memory_space<semaphore_mem>> -> memref<1x!tpu.dma_semaphore, #tpu.memory_space<semaphore_mem>>
    %329 = tpu.memref_squeeze %328 : memref<1x!tpu.dma_semaphore, #tpu.memory_space<semaphore_mem>> -> memref<!tpu.dma_semaphore, #tpu.memory_space<semaphore_mem>>
    tpu.wait_dma2 semaphore(%329 : memref<!tpu.dma_semaphore, #tpu.memory_space<semaphore_mem>>) src(%326 : memref<1x128xf32, #tpu.memory_space<any>>) dst(%327 : memref<1x128xf32, #tpu.memory_space<vmem>>)
    %c15_i32_203 = arith.constant 15 : i32
    %330 = arith.addi %0, %c15_i32_203 : i32
    %331 = arith.index_cast %330 : i32 to index
    %332 = memref.load %arg1[%331] : memref<32xi32, #tpu.memory_space<smem>>
    %c15_i32_204 = arith.constant 15 : i32
    %c0_i32_205 = arith.constant 0 : i32
    %333 = tpu.memref_slice %arg2[%332, %c0_i32_205] : memref<256x128xf32, #tpu.memory_space<any>> -> memref<1x128xf32, #tpu.memory_space<any>>
    %c15_i32_206 = arith.constant 15 : i32
    %c0_i32_207 = arith.constant 0 : i32
    %334 = tpu.memref_slice %arg4[%c15_i32_206, %c0_i32_207] : memref<32x128xf32, #tpu.memory_space<vmem>> -> memref<1x128xf32, #tpu.memory_space<vmem>>
    %335 = tpu.memref_slice %arg5[%c15_i32_204] : memref<32x!tpu.dma_semaphore, #tpu.memory_space<semaphore_mem>> -> memref<1x!tpu.dma_semaphore, #tpu.memory_space<semaphore_mem>>
    %336 = tpu.memref_squeeze %335 : memref<1x!tpu.dma_semaphore, #tpu.memory_space<semaphore_mem>> -> memref<!tpu.dma_semaphore, #tpu.memory_space<semaphore_mem>>
    tpu.wait_dma2 semaphore(%336 : memref<!tpu.dma_semaphore, #tpu.memory_space<semaphore_mem>>) src(%333 : memref<1x128xf32, #tpu.memory_space<any>>) dst(%334 : memref<1x128xf32, #tpu.memory_space<vmem>>)
    %c16_i32_208 = arith.constant 16 : i32
    %337 = arith.addi %0, %c16_i32_208 : i32
    %338 = arith.index_cast %337 : i32 to index
    %339 = memref.load %arg1[%338] : memref<32xi32, #tpu.memory_space<smem>>
    %c16_i32_209 = arith.constant 16 : i32
    %c0_i32_210 = arith.constant 0 : i32
    %340 = tpu.memref_slice %arg2[%339, %c0_i32_210] : memref<256x128xf32, #tpu.memory_space<any>> -> memref<1x128xf32, #tpu.memory_space<any>>
    %c16_i32_211 = arith.constant 16 : i32
    %c0_i32_212 = arith.constant 0 : i32
    %341 = tpu.memref_slice %arg4[%c16_i32_211, %c0_i32_212] : memref<32x128xf32, #tpu.memory_space<vmem>> -> memref<1x128xf32, #tpu.memory_space<vmem>>
    %342 = tpu.memref_slice %arg5[%c16_i32_209] : memref<32x!tpu.dma_semaphore, #tpu.memory_space<semaphore_mem>> -> memref<1x!tpu.dma_semaphore, #tpu.memory_space<semaphore_mem>>
    %343 = tpu.memref_squeeze %342 : memref<1x!tpu.dma_semaphore, #tpu.memory_space<semaphore_mem>> -> memref<!tpu.dma_semaphore, #tpu.memory_space<semaphore_mem>>
    tpu.wait_dma2 semaphore(%343 : memref<!tpu.dma_semaphore, #tpu.memory_space<semaphore_mem>>) src(%340 : memref<1x128xf32, #tpu.memory_space<any>>) dst(%341 : memref<1x128xf32, #tpu.memory_space<vmem>>)
    %c17_i32_213 = arith.constant 17 : i32
    %344 = arith.addi %0, %c17_i32_213 : i32
    %345 = arith.index_cast %344 : i32 to index
    %346 = memref.load %arg1[%345] : memref<32xi32, #tpu.memory_space<smem>>
    %c17_i32_214 = arith.constant 17 : i32
    %c0_i32_215 = arith.constant 0 : i32
    %347 = tpu.memref_slice %arg2[%346, %c0_i32_215] : memref<256x128xf32, #tpu.memory_space<any>> -> memref<1x128xf32, #tpu.memory_space<any>>
    %c17_i32_216 = arith.constant 17 : i32
    %c0_i32_217 = arith.constant 0 : i32
    %348 = tpu.memref_slice %arg4[%c17_i32_216, %c0_i32_217] : memref<32x128xf32, #tpu.memory_space<vmem>> -> memref<1x128xf32, #tpu.memory_space<vmem>>
    %349 = tpu.memref_slice %arg5[%c17_i32_214] : memref<32x!tpu.dma_semaphore, #tpu.memory_space<semaphore_mem>> -> memref<1x!tpu.dma_semaphore, #tpu.memory_space<semaphore_mem>>
    %350 = tpu.memref_squeeze %349 : memref<1x!tpu.dma_semaphore, #tpu.memory_space<semaphore_mem>> -> memref<!tpu.dma_semaphore, #tpu.memory_space<semaphore_mem>>
    tpu.wait_dma2 semaphore(%350 : memref<!tpu.dma_semaphore, #tpu.memory_space<semaphore_mem>>) src(%347 : memref<1x128xf32, #tpu.memory_space<any>>) dst(%348 : memref<1x128xf32, #tpu.memory_space<vmem>>)
    %c18_i32_218 = arith.constant 18 : i32
    %351 = arith.addi %0, %c18_i32_218 : i32
    %352 = arith.index_cast %351 : i32 to index
    %353 = memref.load %arg1[%352] : memref<32xi32, #tpu.memory_space<smem>>
    %c18_i32_219 = arith.constant 18 : i32
    %c0_i32_220 = arith.constant 0 : i32
    %354 = tpu.memref_slice %arg2[%353, %c0_i32_220] : memref<256x128xf32, #tpu.memory_space<any>> -> memref<1x128xf32, #tpu.memory_space<any>>
    %c18_i32_221 = arith.constant 18 : i32
    %c0_i32_222 = arith.constant 0 : i32
    %355 = tpu.memref_slice %arg4[%c18_i32_221, %c0_i32_222] : memref<32x128xf32, #tpu.memory_space<vmem>> -> memref<1x128xf32, #tpu.memory_space<vmem>>
    %356 = tpu.memref_slice %arg5[%c18_i32_219] : memref<32x!tpu.dma_semaphore, #tpu.memory_space<semaphore_mem>> -> memref<1x!tpu.dma_semaphore, #tpu.memory_space<semaphore_mem>>
    %357 = tpu.memref_squeeze %356 : memref<1x!tpu.dma_semaphore, #tpu.memory_space<semaphore_mem>> -> memref<!tpu.dma_semaphore, #tpu.memory_space<semaphore_mem>>
    tpu.wait_dma2 semaphore(%357 : memref<!tpu.dma_semaphore, #tpu.memory_space<semaphore_mem>>) src(%354 : memref<1x128xf32, #tpu.memory_space<any>>) dst(%355 : memref<1x128xf32, #tpu.memory_space<vmem>>)
    %c19_i32_223 = arith.constant 19 : i32
    %358 = arith.addi %0, %c19_i32_223 : i32
    %359 = arith.index_cast %358 : i32 to index
    %360 = memref.load %arg1[%359] : memref<32xi32, #tpu.memory_space<smem>>
    %c19_i32_224 = arith.constant 19 : i32
    %c0_i32_225 = arith.constant 0 : i32
    %361 = tpu.memref_slice %arg2[%360, %c0_i32_225] : memref<256x128xf32, #tpu.memory_space<any>> -> memref<1x128xf32, #tpu.memory_space<any>>
    %c19_i32_226 = arith.constant 19 : i32
    %c0_i32_227 = arith.constant 0 : i32
    %362 = tpu.memref_slice %arg4[%c19_i32_226, %c0_i32_227] : memref<32x128xf32, #tpu.memory_space<vmem>> -> memref<1x128xf32, #tpu.memory_space<vmem>>
    %363 = tpu.memref_slice %arg5[%c19_i32_224] : memref<32x!tpu.dma_semaphore, #tpu.memory_space<semaphore_mem>> -> memref<1x!tpu.dma_semaphore, #tpu.memory_space<semaphore_mem>>
    %364 = tpu.memref_squeeze %363 : memref<1x!tpu.dma_semaphore, #tpu.memory_space<semaphore_mem>> -> memref<!tpu.dma_semaphore, #tpu.memory_space<semaphore_mem>>
    tpu.wait_dma2 semaphore(%364 : memref<!tpu.dma_semaphore, #tpu.memory_space<semaphore_mem>>) src(%361 : memref<1x128xf32, #tpu.memory_space<any>>) dst(%362 : memref<1x128xf32, #tpu.memory_space<vmem>>)
    %c20_i32_228 = arith.constant 20 : i32
    %365 = arith.addi %0, %c20_i32_228 : i32
    %366 = arith.index_cast %365 : i32 to index
    %367 = memref.load %arg1[%366] : memref<32xi32, #tpu.memory_space<smem>>
    %c20_i32_229 = arith.constant 20 : i32
    %c0_i32_230 = arith.constant 0 : i32
    %368 = tpu.memref_slice %arg2[%367, %c0_i32_230] : memref<256x128xf32, #tpu.memory_space<any>> -> memref<1x128xf32, #tpu.memory_space<any>>
    %c20_i32_231 = arith.constant 20 : i32
    %c0_i32_232 = arith.constant 0 : i32
    %369 = tpu.memref_slice %arg4[%c20_i32_231, %c0_i32_232] : memref<32x128xf32, #tpu.memory_space<vmem>> -> memref<1x128xf32, #tpu.memory_space<vmem>>
    %370 = tpu.memref_slice %arg5[%c20_i32_229] : memref<32x!tpu.dma_semaphore, #tpu.memory_space<semaphore_mem>> -> memref<1x!tpu.dma_semaphore, #tpu.memory_space<semaphore_mem>>
    %371 = tpu.memref_squeeze %370 : memref<1x!tpu.dma_semaphore, #tpu.memory_space<semaphore_mem>> -> memref<!tpu.dma_semaphore, #tpu.memory_space<semaphore_mem>>
    tpu.wait_dma2 semaphore(%371 : memref<!tpu.dma_semaphore, #tpu.memory_space<semaphore_mem>>) src(%368 : memref<1x128xf32, #tpu.memory_space<any>>) dst(%369 : memref<1x128xf32, #tpu.memory_space<vmem>>)
    %c21_i32_233 = arith.constant 21 : i32
    %372 = arith.addi %0, %c21_i32_233 : i32
    %373 = arith.index_cast %372 : i32 to index
    %374 = memref.load %arg1[%373] : memref<32xi32, #tpu.memory_space<smem>>
    %c21_i32_234 = arith.constant 21 : i32
    %c0_i32_235 = arith.constant 0 : i32
    %375 = tpu.memref_slice %arg2[%374, %c0_i32_235] : memref<256x128xf32, #tpu.memory_space<any>> -> memref<1x128xf32, #tpu.memory_space<any>>
    %c21_i32_236 = arith.constant 21 : i32
    %c0_i32_237 = arith.constant 0 : i32
    %376 = tpu.memref_slice %arg4[%c21_i32_236, %c0_i32_237] : memref<32x128xf32, #tpu.memory_space<vmem>> -> memref<1x128xf32, #tpu.memory_space<vmem>>
    %377 = tpu.memref_slice %arg5[%c21_i32_234] : memref<32x!tpu.dma_semaphore, #tpu.memory_space<semaphore_mem>> -> memref<1x!tpu.dma_semaphore, #tpu.memory_space<semaphore_mem>>
    %378 = tpu.memref_squeeze %377 : memref<1x!tpu.dma_semaphore, #tpu.memory_space<semaphore_mem>> -> memref<!tpu.dma_semaphore, #tpu.memory_space<semaphore_mem>>
    tpu.wait_dma2 semaphore(%378 : memref<!tpu.dma_semaphore, #tpu.memory_space<semaphore_mem>>) src(%375 : memref<1x128xf32, #tpu.memory_space<any>>) dst(%376 : memref<1x128xf32, #tpu.memory_space<vmem>>)
    %c22_i32_238 = arith.constant 22 : i32
    %379 = arith.addi %0, %c22_i32_238 : i32
    %380 = arith.index_cast %379 : i32 to index
    %381 = memref.load %arg1[%380] : memref<32xi32, #tpu.memory_space<smem>>
    %c22_i32_239 = arith.constant 22 : i32
    %c0_i32_240 = arith.constant 0 : i32
    %382 = tpu.memref_slice %arg2[%381, %c0_i32_240] : memref<256x128xf32, #tpu.memory_space<any>> -> memref<1x128xf32, #tpu.memory_space<any>>
    %c22_i32_241 = arith.constant 22 : i32
    %c0_i32_242 = arith.constant 0 : i32
    %383 = tpu.memref_slice %arg4[%c22_i32_241, %c0_i32_242] : memref<32x128xf32, #tpu.memory_space<vmem>> -> memref<1x128xf32, #tpu.memory_space<vmem>>
    %384 = tpu.memref_slice %arg5[%c22_i32_239] : memref<32x!tpu.dma_semaphore, #tpu.memory_space<semaphore_mem>> -> memref<1x!tpu.dma_semaphore, #tpu.memory_space<semaphore_mem>>
    %385 = tpu.memref_squeeze %384 : memref<1x!tpu.dma_semaphore, #tpu.memory_space<semaphore_mem>> -> memref<!tpu.dma_semaphore, #tpu.memory_space<semaphore_mem>>
    tpu.wait_dma2 semaphore(%385 : memref<!tpu.dma_semaphore, #tpu.memory_space<semaphore_mem>>) src(%382 : memref<1x128xf32, #tpu.memory_space<any>>) dst(%383 : memref<1x128xf32, #tpu.memory_space<vmem>>)
    %c23_i32_243 = arith.constant 23 : i32
    %386 = arith.addi %0, %c23_i32_243 : i32
    %387 = arith.index_cast %386 : i32 to index
    %388 = memref.load %arg1[%387] : memref<32xi32, #tpu.memory_space<smem>>
    %c23_i32_244 = arith.constant 23 : i32
    %c0_i32_245 = arith.constant 0 : i32
    %389 = tpu.memref_slice %arg2[%388, %c0_i32_245] : memref<256x128xf32, #tpu.memory_space<any>> -> memref<1x128xf32, #tpu.memory_space<any>>
    %c23_i32_246 = arith.constant 23 : i32
    %c0_i32_247 = arith.constant 0 : i32
    %390 = tpu.memref_slice %arg4[%c23_i32_246, %c0_i32_247] : memref<32x128xf32, #tpu.memory_space<vmem>> -> memref<1x128xf32, #tpu.memory_space<vmem>>
    %391 = tpu.memref_slice %arg5[%c23_i32_244] : memref<32x!tpu.dma_semaphore, #tpu.memory_space<semaphore_mem>> -> memref<1x!tpu.dma_semaphore, #tpu.memory_space<semaphore_mem>>
    %392 = tpu.memref_squeeze %391 : memref<1x!tpu.dma_semaphore, #tpu.memory_space<semaphore_mem>> -> memref<!tpu.dma_semaphore, #tpu.memory_space<semaphore_mem>>
    tpu.wait_dma2 semaphore(%392 : memref<!tpu.dma_semaphore, #tpu.memory_space<semaphore_mem>>) src(%389 : memref<1x128xf32, #tpu.memory_space<any>>) dst(%390 : memref<1x128xf32, #tpu.memory_space<vmem>>)
    %c24_i32_248 = arith.constant 24 : i32
    %393 = arith.addi %0, %c24_i32_248 : i32
    %394 = arith.index_cast %393 : i32 to index
    %395 = memref.load %arg1[%394] : memref<32xi32, #tpu.memory_space<smem>>
    %c24_i32_249 = arith.constant 24 : i32
    %c0_i32_250 = arith.constant 0 : i32
    %396 = tpu.memref_slice %arg2[%395, %c0_i32_250] : memref<256x128xf32, #tpu.memory_space<any>> -> memref<1x128xf32, #tpu.memory_space<any>>
    %c24_i32_251 = arith.constant 24 : i32
    %c0_i32_252 = arith.constant 0 : i32
    %397 = tpu.memref_slice %arg4[%c24_i32_251, %c0_i32_252] : memref<32x128xf32, #tpu.memory_space<vmem>> -> memref<1x128xf32, #tpu.memory_space<vmem>>
    %398 = tpu.memref_slice %arg5[%c24_i32_249] : memref<32x!tpu.dma_semaphore, #tpu.memory_space<semaphore_mem>> -> memref<1x!tpu.dma_semaphore, #tpu.memory_space<semaphore_mem>>
    %399 = tpu.memref_squeeze %398 : memref<1x!tpu.dma_semaphore, #tpu.memory_space<semaphore_mem>> -> memref<!tpu.dma_semaphore, #tpu.memory_space<semaphore_mem>>
    tpu.wait_dma2 semaphore(%399 : memref<!tpu.dma_semaphore, #tpu.memory_space<semaphore_mem>>) src(%396 : memref<1x128xf32, #tpu.memory_space<any>>) dst(%397 : memref<1x128xf32, #tpu.memory_space<vmem>>)
    %c25_i32_253 = arith.constant 25 : i32
    %400 = arith.addi %0, %c25_i32_253 : i32
    %401 = arith.index_cast %400 : i32 to index
    %402 = memref.load %arg1[%401] : memref<32xi32, #tpu.memory_space<smem>>
    %c25_i32_254 = arith.constant 25 : i32
    %c0_i32_255 = arith.constant 0 : i32
    %403 = tpu.memref_slice %arg2[%402, %c0_i32_255] : memref<256x128xf32, #tpu.memory_space<any>> -> memref<1x128xf32, #tpu.memory_space<any>>
    %c25_i32_256 = arith.constant 25 : i32
    %c0_i32_257 = arith.constant 0 : i32
    %404 = tpu.memref_slice %arg4[%c25_i32_256, %c0_i32_257] : memref<32x128xf32, #tpu.memory_space<vmem>> -> memref<1x128xf32, #tpu.memory_space<vmem>>
    %405 = tpu.memref_slice %arg5[%c25_i32_254] : memref<32x!tpu.dma_semaphore, #tpu.memory_space<semaphore_mem>> -> memref<1x!tpu.dma_semaphore, #tpu.memory_space<semaphore_mem>>
    %406 = tpu.memref_squeeze %405 : memref<1x!tpu.dma_semaphore, #tpu.memory_space<semaphore_mem>> -> memref<!tpu.dma_semaphore, #tpu.memory_space<semaphore_mem>>
    tpu.wait_dma2 semaphore(%406 : memref<!tpu.dma_semaphore, #tpu.memory_space<semaphore_mem>>) src(%403 : memref<1x128xf32, #tpu.memory_space<any>>) dst(%404 : memref<1x128xf32, #tpu.memory_space<vmem>>)
    %c26_i32_258 = arith.constant 26 : i32
    %407 = arith.addi %0, %c26_i32_258 : i32
    %408 = arith.index_cast %407 : i32 to index
    %409 = memref.load %arg1[%408] : memref<32xi32, #tpu.memory_space<smem>>
    %c26_i32_259 = arith.constant 26 : i32
    %c0_i32_260 = arith.constant 0 : i32
    %410 = tpu.memref_slice %arg2[%409, %c0_i32_260] : memref<256x128xf32, #tpu.memory_space<any>> -> memref<1x128xf32, #tpu.memory_space<any>>
    %c26_i32_261 = arith.constant 26 : i32
    %c0_i32_262 = arith.constant 0 : i32
    %411 = tpu.memref_slice %arg4[%c26_i32_261, %c0_i32_262] : memref<32x128xf32, #tpu.memory_space<vmem>> -> memref<1x128xf32, #tpu.memory_space<vmem>>
    %412 = tpu.memref_slice %arg5[%c26_i32_259] : memref<32x!tpu.dma_semaphore, #tpu.memory_space<semaphore_mem>> -> memref<1x!tpu.dma_semaphore, #tpu.memory_space<semaphore_mem>>
    %413 = tpu.memref_squeeze %412 : memref<1x!tpu.dma_semaphore, #tpu.memory_space<semaphore_mem>> -> memref<!tpu.dma_semaphore, #tpu.memory_space<semaphore_mem>>
    tpu.wait_dma2 semaphore(%413 : memref<!tpu.dma_semaphore, #tpu.memory_space<semaphore_mem>>) src(%410 : memref<1x128xf32, #tpu.memory_space<any>>) dst(%411 : memref<1x128xf32, #tpu.memory_space<vmem>>)
    %c27_i32_263 = arith.constant 27 : i32
    %414 = arith.addi %0, %c27_i32_263 : i32
    %415 = arith.index_cast %414 : i32 to index
    %416 = memref.load %arg1[%415] : memref<32xi32, #tpu.memory_space<smem>>
    %c27_i32_264 = arith.constant 27 : i32
    %c0_i32_265 = arith.constant 0 : i32
    %417 = tpu.memref_slice %arg2[%416, %c0_i32_265] : memref<256x128xf32, #tpu.memory_space<any>> -> memref<1x128xf32, #tpu.memory_space<any>>
    %c27_i32_266 = arith.constant 27 : i32
    %c0_i32_267 = arith.constant 0 : i32
    %418 = tpu.memref_slice %arg4[%c27_i32_266, %c0_i32_267] : memref<32x128xf32, #tpu.memory_space<vmem>> -> memref<1x128xf32, #tpu.memory_space<vmem>>
    %419 = tpu.memref_slice %arg5[%c27_i32_264] : memref<32x!tpu.dma_semaphore, #tpu.memory_space<semaphore_mem>> -> memref<1x!tpu.dma_semaphore, #tpu.memory_space<semaphore_mem>>
    %420 = tpu.memref_squeeze %419 : memref<1x!tpu.dma_semaphore, #tpu.memory_space<semaphore_mem>> -> memref<!tpu.dma_semaphore, #tpu.memory_space<semaphore_mem>>
    tpu.wait_dma2 semaphore(%420 : memref<!tpu.dma_semaphore, #tpu.memory_space<semaphore_mem>>) src(%417 : memref<1x128xf32, #tpu.memory_space<any>>) dst(%418 : memref<1x128xf32, #tpu.memory_space<vmem>>)
    %c28_i32_268 = arith.constant 28 : i32
    %421 = arith.addi %0, %c28_i32_268 : i32
    %422 = arith.index_cast %421 : i32 to index
    %423 = memref.load %arg1[%422] : memref<32xi32, #tpu.memory_space<smem>>
    %c28_i32_269 = arith.constant 28 : i32
    %c0_i32_270 = arith.constant 0 : i32
    %424 = tpu.memref_slice %arg2[%423, %c0_i32_270] : memref<256x128xf32, #tpu.memory_space<any>> -> memref<1x128xf32, #tpu.memory_space<any>>
    %c28_i32_271 = arith.constant 28 : i32
    %c0_i32_272 = arith.constant 0 : i32
    %425 = tpu.memref_slice %arg4[%c28_i32_271, %c0_i32_272] : memref<32x128xf32, #tpu.memory_space<vmem>> -> memref<1x128xf32, #tpu.memory_space<vmem>>
    %426 = tpu.memref_slice %arg5[%c28_i32_269] : memref<32x!tpu.dma_semaphore, #tpu.memory_space<semaphore_mem>> -> memref<1x!tpu.dma_semaphore, #tpu.memory_space<semaphore_mem>>
    %427 = tpu.memref_squeeze %426 : memref<1x!tpu.dma_semaphore, #tpu.memory_space<semaphore_mem>> -> memref<!tpu.dma_semaphore, #tpu.memory_space<semaphore_mem>>
    tpu.wait_dma2 semaphore(%427 : memref<!tpu.dma_semaphore, #tpu.memory_space<semaphore_mem>>) src(%424 : memref<1x128xf32, #tpu.memory_space<any>>) dst(%425 : memref<1x128xf32, #tpu.memory_space<vmem>>)
    %c29_i32_273 = arith.constant 29 : i32
    %428 = arith.addi %0, %c29_i32_273 : i32
    %429 = arith.index_cast %428 : i32 to index
    %430 = memref.load %arg1[%429] : memref<32xi32, #tpu.memory_space<smem>>
    %c29_i32_274 = arith.constant 29 : i32
    %c0_i32_275 = arith.constant 0 : i32
    %431 = tpu.memref_slice %arg2[%430, %c0_i32_275] : memref<256x128xf32, #tpu.memory_space<any>> -> memref<1x128xf32, #tpu.memory_space<any>>
    %c29_i32_276 = arith.constant 29 : i32
    %c0_i32_277 = arith.constant 0 : i32
    %432 = tpu.memref_slice %arg4[%c29_i32_276, %c0_i32_277] : memref<32x128xf32, #tpu.memory_space<vmem>> -> memref<1x128xf32, #tpu.memory_space<vmem>>
    %433 = tpu.memref_slice %arg5[%c29_i32_274] : memref<32x!tpu.dma_semaphore, #tpu.memory_space<semaphore_mem>> -> memref<1x!tpu.dma_semaphore, #tpu.memory_space<semaphore_mem>>
    %434 = tpu.memref_squeeze %433 : memref<1x!tpu.dma_semaphore, #tpu.memory_space<semaphore_mem>> -> memref<!tpu.dma_semaphore, #tpu.memory_space<semaphore_mem>>
    tpu.wait_dma2 semaphore(%434 : memref<!tpu.dma_semaphore, #tpu.memory_space<semaphore_mem>>) src(%431 : memref<1x128xf32, #tpu.memory_space<any>>) dst(%432 : memref<1x128xf32, #tpu.memory_space<vmem>>)
    %c30_i32_278 = arith.constant 30 : i32
    %435 = arith.addi %0, %c30_i32_278 : i32
    %436 = arith.index_cast %435 : i32 to index
    %437 = memref.load %arg1[%436] : memref<32xi32, #tpu.memory_space<smem>>
    %c30_i32_279 = arith.constant 30 : i32
    %c0_i32_280 = arith.constant 0 : i32
    %438 = tpu.memref_slice %arg2[%437, %c0_i32_280] : memref<256x128xf32, #tpu.memory_space<any>> -> memref<1x128xf32, #tpu.memory_space<any>>
    %c30_i32_281 = arith.constant 30 : i32
    %c0_i32_282 = arith.constant 0 : i32
    %439 = tpu.memref_slice %arg4[%c30_i32_281, %c0_i32_282] : memref<32x128xf32, #tpu.memory_space<vmem>> -> memref<1x128xf32, #tpu.memory_space<vmem>>
    %440 = tpu.memref_slice %arg5[%c30_i32_279] : memref<32x!tpu.dma_semaphore, #tpu.memory_space<semaphore_mem>> -> memref<1x!tpu.dma_semaphore, #tpu.memory_space<semaphore_mem>>
    %441 = tpu.memref_squeeze %440 : memref<1x!tpu.dma_semaphore, #tpu.memory_space<semaphore_mem>> -> memref<!tpu.dma_semaphore, #tpu.memory_space<semaphore_mem>>
    tpu.wait_dma2 semaphore(%441 : memref<!tpu.dma_semaphore, #tpu.memory_space<semaphore_mem>>) src(%438 : memref<1x128xf32, #tpu.memory_space<any>>) dst(%439 : memref<1x128xf32, #tpu.memory_space<vmem>>)
    %c31_i32_283 = arith.constant 31 : i32
    %442 = arith.addi %0, %c31_i32_283 : i32
    %443 = arith.index_cast %442 : i32 to index
    %444 = memref.load %arg1[%443] : memref<32xi32, #tpu.memory_space<smem>>
    %c31_i32_284 = arith.constant 31 : i32
    %c0_i32_285 = arith.constant 0 : i32
    %445 = tpu.memref_slice %arg2[%444, %c0_i32_285] : memref<256x128xf32, #tpu.memory_space<any>> -> memref<1x128xf32, #tpu.memory_space<any>>
    %c31_i32_286 = arith.constant 31 : i32
    %c0_i32_287 = arith.constant 0 : i32
    %446 = tpu.memref_slice %arg4[%c31_i32_286, %c0_i32_287] : memref<32x128xf32, #tpu.memory_space<vmem>> -> memref<1x128xf32, #tpu.memory_space<vmem>>
    %447 = tpu.memref_slice %arg5[%c31_i32_284] : memref<32x!tpu.dma_semaphore, #tpu.memory_space<semaphore_mem>> -> memref<1x!tpu.dma_semaphore, #tpu.memory_space<semaphore_mem>>
    %448 = tpu.memref_squeeze %447 : memref<1x!tpu.dma_semaphore, #tpu.memory_space<semaphore_mem>> -> memref<!tpu.dma_semaphore, #tpu.memory_space<semaphore_mem>>
    tpu.wait_dma2 semaphore(%448 : memref<!tpu.dma_semaphore, #tpu.memory_space<semaphore_mem>>) src(%445 : memref<1x128xf32, #tpu.memory_space<any>>) dst(%446 : memref<1x128xf32, #tpu.memory_space<vmem>>)
    %c0 = arith.constant 0 : index
    %c0_288 = arith.constant 0 : index
    %449 = vector.load %arg4[%c0, %c0_288] : memref<32x128xf32, #tpu.memory_space<vmem>>, vector<32x128xf32>
    %c0_289 = arith.constant 0 : index
    %c0_290 = arith.constant 0 : index
    %450 = vector.load %arg3[%c0_289, %c0_290] : memref<32x128xf32, #tpu.memory_space<vmem>>, vector<32x128xf32>
    tpu.vector_store %arg3[%c0_289, %c0_290], %449 {strides = array<i32>} : memref<32x128xf32, #tpu.memory_space<vmem>>, vector<32x128xf32>,
    return
  }
  func.func @transform_1(%arg0: i32, %arg1: memref<32xi32, #tpu.memory_space<smem>>) -> (i32, i32) {
    %c0_i32 = arith.constant 0 : i32
    %c0_i32_0 = arith.constant 0 : i32
    return %arg0, %c0_i32 : i32, i32
  }
}

</mosaic_0001>

<llo_original>
// kernel: tpu_custom_call.1
$region0: #{tpu_custom_call.1}
  #allocation0 [shape = 'u32[]', space=smem, size = 0x4, offset = 0x4, fixed_abs, tag = 'smem constant byte address 0x4 - core index']
  #allocation1 [shape = 'u32[144,128]{1,0:T(1,128)}', space=vmem, size = 0x12000, scoped, tag = 'internal scratch']
  #allocation2 [shape = 'f32[32,128]{1,0:T(8,128)}', space=vmem, size = 0x4000, scoped, tag = 'scratch operand']
  #allocation3 [shape = 's32[32]{0}', space=sflag, size = 0x80, scoped, tag = 'scratch operand']
  #allocation4 [shape = 's32[1]{0}', space=sflag, size = 0x4, scoped, tag = 'scoped memory for tpu_custom_call.1']
  #allocation5 [shape = 'u8[512]{0}', space=smem, size = 0x200, scoped, tag = 'prefetched SMEM operand 0']
  #allocation8 [shape = 's32[]', space=sflag, size = 0x4, offset = 0, fixed_abs, tag = 'sflag constant byte address 0x0 - dummy sync flag']
  #allocation9 [shape = 's32[]', space=sflag, size = 0x4, offset = 0, fixed_abs, tag = 'sflag constant byte address 0x0 - dummy sync flag']
  #allocation10 [shape = 'u32[]', space=smem, size = 0x4, offset = 0x44, fixed_abs, tag = 'smem constant byte address 0x44 - assertion arg 0']
  #allocation11 [shape = 'u32[]', space=smem, size = 0x4, offset = 0x48, fixed_abs, tag = 'smem constant byte address 0x48 - assertion arg 1']
  #allocation12 [shape = 's32[]', space=sflag, size = 0x4, offset = 0, fixed_abs, tag = 'sflag constant byte address 0x0 - dummy sync flag']
  #allocation13 [shape = 's32[]', space=sflag, size = 0x4, offset = 0, fixed_abs, tag = 'sflag constant byte address 0x0 - dummy sync flag']
  #allocation14 [shape = 's32[]', space=sflag, size = 0x4, offset = 0, fixed_abs, tag = 'sflag constant byte address 0x0 - dummy sync flag']
  #allocation15 [shape = 's32[]', space=sflag, size = 0x4, offset = 0, fixed_abs, tag = 'sflag constant byte address 0x0 - dummy sync flag']
  #allocation16 [shape = 's32[]', space=sflag, size = 0x4, offset = 0, fixed_abs, tag = 'sflag constant byte address 0x0 - dummy sync flag']
  #allocation17 [shape = 's32[]', space=sflag, size = 0x4, offset = 0, fixed_abs, tag = 'sflag constant byte address 0x0 - dummy sync flag']
  #allocation18 [shape = 's32[]', space=sflag, size = 0x4, offset = 0, fixed_abs, tag = 'sflag constant byte address 0x0 - dummy sync flag']
  #allocation19 [shape = 's32[]', space=sflag, size = 0x4, offset = 0, fixed_abs, tag = 'sflag constant byte address 0x0 - dummy sync flag']
  #allocation20 [shape = 's32[]', space=sflag, size = 0x4, offset = 0, fixed_abs, tag = 'sflag constant byte address 0x0 - dummy sync flag']
  #allocation21 [shape = 's32[]', space=sflag, size = 0x4, offset = 0, fixed_abs, tag = 'sflag constant byte address 0x0 - dummy sync flag']
  #allocation22 [shape = 's32[]', space=sflag, size = 0x4, offset = 0, fixed_abs, tag = 'sflag constant byte address 0x0 - dummy sync flag']
  #allocation23 [shape = 's32[]', space=sflag, size = 0x4, offset = 0, fixed_abs, tag = 'sflag constant byte address 0x0 - dummy sync flag']
  #allocation24 [shape = 's32[]', space=sflag, size = 0x4, offset = 0, fixed_abs, tag = 'sflag constant byte address 0x0 - dummy sync flag']
  #allocation25 [shape = 's32[]', space=sflag, size = 0x4, offset = 0, fixed_abs, tag = 'sflag constant byte address 0x0 - dummy sync flag']
  #allocation26 [shape = 's32[]', space=sflag, size = 0x4, offset = 0, fixed_abs, tag = 'sflag constant byte address 0x0 - dummy sync flag']
  #allocation27 [shape = 's32[]', space=sflag, size = 0x4, offset = 0, fixed_abs, tag = 'sflag constant byte address 0x0 - dummy sync flag']
  #allocation28 [shape = 's32[]', space=sflag, size = 0x4, offset = 0, fixed_abs, tag = 'sflag constant byte address 0x0 - dummy sync flag']
  #allocation29 [shape = 's32[]', space=sflag, size = 0x4, offset = 0, fixed_abs, tag = 'sflag constant byte address 0x0 - dummy sync flag']
  #allocation30 [shape = 's32[]', space=sflag, size = 0x4, offset = 0, fixed_abs, tag = 'sflag constant byte address 0x0 - dummy sync flag']
  #allocation31 [shape = 's32[]', space=sflag, size = 0x4, offset = 0, fixed_abs, tag = 'sflag constant byte address 0x0 - dummy sync flag']
  #allocation32 [shape = 's32[]', space=sflag, size = 0x4, offset = 0, fixed_abs, tag = 'sflag constant byte address 0x0 - dummy sync flag']
  #allocation33 [shape = 's32[]', space=sflag, size = 0x4, offset = 0, fixed_abs, tag = 'sflag constant byte address 0x0 - dummy sync flag']
  #allocation34 [shape = 's32[]', space=sflag, size = 0x4, offset = 0, fixed_abs, tag = 'sflag constant byte address 0x0 - dummy sync flag']
  #allocation35 [shape = 's32[]', space=sflag, size = 0x4, offset = 0, fixed_abs, tag = 'sflag constant byte address 0x0 - dummy sync flag']
  #allocation36 [shape = 's32[]', space=sflag, size = 0x4, offset = 0, fixed_abs, tag = 'sflag constant byte address 0x0 - dummy sync flag']
  #allocation37 [shape = 's32[]', space=sflag, size = 0x4, offset = 0, fixed_abs, tag = 'sflag constant byte address 0x0 - dummy sync flag']
  #allocation38 [shape = 's32[]', space=sflag, size = 0x4, offset = 0, fixed_abs, tag = 'sflag constant byte address 0x0 - dummy sync flag']
  #allocation39 [shape = 's32[]', space=sflag, size = 0x4, offset = 0, fixed_abs, tag = 'sflag constant byte address 0x0 - dummy sync flag']
  #allocation40 [shape = 's32[]', space=sflag, size = 0x4, offset = 0, fixed_abs, tag = 'sflag constant byte address 0x0 - dummy sync flag']
  #allocation41 [shape = 's32[]', space=sflag, size = 0x4, offset = 0, fixed_abs, tag = 'sflag constant byte address 0x0 - dummy sync flag']
  #allocation42 [shape = 's32[]', space=sflag, size = 0x4, offset = 0, fixed_abs, tag = 'sflag constant byte address 0x0 - dummy sync flag']
  #allocation43 [shape = 's32[]', space=sflag, size = 0x4, offset = 0, fixed_abs, tag = 'sflag constant byte address 0x0 - dummy sync flag']
  #allocation44 [shape = 's32[]', space=sflag, size = 0x4, offset = 0, fixed_abs, tag = 'sflag constant byte address 0x0 - dummy sync flag']
  #allocation45 [shape = 's32[]', space=sflag, size = 0x4, offset = 0, fixed_abs, tag = 'sflag constant byte address 0x0 - dummy sync flag']
  #allocation46 [shape = 's32[]', space=sflag, size = 0x4, offset = 0, fixed_abs, tag = 'sflag constant byte address 0x0 - dummy sync flag']
  #allocation47 [shape = 's32[]', space=sflag, size = 0x4, offset = 0, fixed_abs, tag = 'sflag constant byte address 0x0 - dummy sync flag']
  #allocation48 [shape = 's32[]', space=sflag, size = 0x4, offset = 0, fixed_abs, tag = 'sflag constant byte address 0x0 - dummy sync flag']
  #allocation49 [shape = 's32[]', space=sflag, size = 0x4, offset = 0, fixed_abs, tag = 'sflag constant byte address 0x0 - dummy sync flag']
  #allocation50 [shape = 's32[]', space=sflag, size = 0x4, offset = 0, fixed_abs, tag = 'sflag constant byte address 0x0 - dummy sync flag']
  #allocation51 [shape = 's32[]', space=sflag, size = 0x4, offset = 0, fixed_abs, tag = 'sflag constant byte address 0x0 - dummy sync flag']
  #allocation52 [shape = 's32[]', space=sflag, size = 0x4, offset = 0, fixed_abs, tag = 'sflag constant byte address 0x0 - dummy sync flag']
  #allocation53 [shape = 's32[]', space=sflag, size = 0x4, offset = 0, fixed_abs, tag = 'sflag constant byte address 0x0 - dummy sync flag']
  #allocation54 [shape = 's32[]', space=sflag, size = 0x4, offset = 0, fixed_abs, tag = 'sflag constant byte address 0x0 - dummy sync flag']
  #allocation55 [shape = 's32[]', space=sflag, size = 0x4, offset = 0, fixed_abs, tag = 'sflag constant byte address 0x0 - dummy sync flag']
  #allocation56 [shape = 's32[]', space=sflag, size = 0x4, offset = 0, fixed_abs, tag = 'sflag constant byte address 0x0 - dummy sync flag']
  #allocation57 [shape = 's32[]', space=sflag, size = 0x4, offset = 0, fixed_abs, tag = 'sflag constant byte address 0x0 - dummy sync flag']
  #allocation58 [shape = 's32[]', space=sflag, size = 0x4, offset = 0, fixed_abs, tag = 'sflag constant byte address 0x0 - dummy sync flag']
  #allocation59 [shape = 's32[]', space=sflag, size = 0x4, offset = 0, fixed_abs, tag = 'sflag constant byte address 0x0 - dummy sync flag']
  #allocation60 [shape = 's32[]', space=sflag, size = 0x4, offset = 0, fixed_abs, tag = 'sflag constant byte address 0x0 - dummy sync flag']
  #allocation61 [shape = 's32[]', space=sflag, size = 0x4, offset = 0, fixed_abs, tag = 'sflag constant byte address 0x0 - dummy sync flag']
  #allocation62 [shape = 's32[]', space=sflag, size = 0x4, offset = 0, fixed_abs, tag = 'sflag constant byte address 0x0 - dummy sync flag']
  #allocation63 [shape = 's32[]', space=sflag, size = 0x4, offset = 0, fixed_abs, tag = 'sflag constant byte address 0x0 - dummy sync flag']
  #allocation64 [shape = 's32[]', space=sflag, size = 0x4, offset = 0, fixed_abs, tag = 'sflag constant byte address 0x0 - dummy sync flag']
  #allocation65 [shape = 's32[]', space=sflag, size = 0x4, offset = 0, fixed_abs, tag = 'sflag constant byte address 0x0 - dummy sync flag']
  #allocation66 [shape = 's32[]', space=sflag, size = 0x4, offset = 0, fixed_abs, tag = 'sflag constant byte address 0x0 - dummy sync flag']
  #allocation67 [shape = 's32[]', space=sflag, size = 0x4, offset = 0, fixed_abs, tag = 'sflag constant byte address 0x0 - dummy sync flag']
  #allocation68 [shape = 's32[]', space=sflag, size = 0x4, offset = 0, fixed_abs, tag = 'sflag constant byte address 0x0 - dummy sync flag']
  #allocation69 [shape = 's32[]', space=sflag, size = 0x4, offset = 0, fixed_abs, tag = 'sflag constant byte address 0x0 - dummy sync flag']
  #allocation70 [shape = 's32[]', space=sflag, size = 0x4, offset = 0, fixed_abs, tag = 'sflag constant byte address 0x0 - dummy sync flag']
  #allocation71 [shape = 's32[]', space=sflag, size = 0x4, offset = 0, fixed_abs, tag = 'sflag constant byte address 0x0 - dummy sync flag']
  #allocation72 [shape = 's32[]', space=sflag, size = 0x4, offset = 0, fixed_abs, tag = 'sflag constant byte address 0x0 - dummy sync flag']
  #allocation73 [shape = 's32[]', space=sflag, size = 0x4, offset = 0, fixed_abs, tag = 'sflag constant byte address 0x0 - dummy sync flag']
  %s0 = inlined_call_operand.hbm [shape: s32[32], index: 0, kind: input, shape index: {}]
  %s1 = inlined_call_operand.hbm [shape: f32[256,128], index: 1, kind: input, shape index: {}]
  %s2 = inlined_call_operand.hbm [shape: f32[32,128], index: 2, kind: output, shape index: {}]
  %s3 = sld [smem:[#allocation0]]
  $region138: #{tpu_custom_call.1} parent=0
    _
  %s5 = ssub.s32 1, %s3
  %s6 = scalar_select 0, %s5, %s3
  %8 = dma.hbm_to_smem %s0, 16, [#allocation5], [#allocation4]
  %9 = dma.done [#allocation4], 16
  %10 = sfence
  $region1: #{tpu_custom_call.1} parent=0
    #allocation6 [shape = 'u8[16384]{0}', space=vmem, size = 0x4000, scoped, tag = 'output window, operand 0, single buffered']
    #allocation7 [shape = 's32[1]{0}', space=sflag, size = 0x4, scoped, tag = 'scoped memory for tpu_custom_call.1']
    %11 = vsyncpa [#allocation7], 0
    %s12 = smul.u32 0, 32
    %s13 = sld [smem:[#allocation5 + %s12]]
    %s14 = smul.addr %s13, 16
    %s15 = scalar_lea.hbm %s1, %s14
    // Predicated region
    $region2: #{tpu_custom_call.1} parent=1 // pred_check
      _
    $region3: #{tpu_custom_call.1} parent=1 // pred_check_branch
      %17 = sbr.rel target = $region5
    $region4: #{tpu_custom_call.1} parent=1 // pred_region
      %18 = sst [smem:[#allocation10]] [#allocation9]
      %19 = sst [smem:[#allocation11]] [#allocation8]
    $region5: #{tpu_custom_call.1} parent=1 // pred_fallthru
      _
    %21 = shalt.err (0)
    %s23 = sshll.u32 [#allocation2], 4
    %s24 = int_to_ptr.vmem [resolvable:$true] %s23
    %26 = dma.hbm_to_vmem [thread:$0]  %s15, 16, %s24, [#allocation3]
    %s27 = sadd.s32 %s12, 1
    %s28 = sld [smem:[#allocation5 + %s27]]
    %s29 = smul.addr %s28, 16
    %s30 = scalar_lea.hbm %s1, %s29
    %s31 = scalar_lea.vmem [#allocation2], 1
    %s32 = scalar_lea.sflag [#allocation3], 1
    // Predicated region
    $region6: #{tpu_custom_call.1} parent=1 // pred_check
      _
    $region7: #{tpu_custom_call.1} parent=1 // pred_check_branch
      %34 = sbr.rel target = $region9
    $region8: #{tpu_custom_call.1} parent=1 // pred_region
      %35 = sst [smem:[#allocation10]] [#allocation13]
      %36 = sst [smem:[#allocation11]] [#allocation12]
    $region9: #{tpu_custom_call.1} parent=1 // pred_fallthru
      _
    %38 = shalt.err (0)
    %s40 = sshll.u32 %s31, 4
    %s41 = int_to_ptr.vmem [resolvable:$true] %s40
    %43 = dma.hbm_to_vmem [thread:$0]  %s30, 16, %s41, %s32
    %s44 = sadd.s32 %s12, 2
    %s45 = sld [smem:[#allocation5 + %s44]]
    %s46 = smul.addr %s45, 16
    %s47 = scalar_lea.hbm %s1, %s46
    %s48 = scalar_lea.vmem [#allocation2], 2
    %s49 = scalar_lea.sflag [#allocation3], 2
    // Predicated region
    $region10: #{tpu_custom_call.1} parent=1 // pred_check
      _
    $region11: #{tpu_custom_call.1} parent=1 // pred_check_branch
      %51 = sbr.rel target = $region13
    $region12: #{tpu_custom_call.1} parent=1 // pred_region
      %52 = sst [smem:[#allocation10]] [#allocation15]
      %53 = sst [smem:[#allocation11]] [#allocation14]
    $region13: #{tpu_custom_call.1} parent=1 // pred_fallthru
      _
    %55 = shalt.err (0)
    %s57 = sshll.u32 %s48, 4
    %s58 = int_to_ptr.vmem [resolvable:$true] %s57
    %60 = dma.hbm_to_vmem [thread:$0]  %s47, 16, %s58, %s49
    %s61 = sadd.s32 %s12, 3
    %s62 = sld [smem:[#allocation5 + %s61]]
    %s63 = smul.addr %s62, 16
    %s64 = scalar_lea.hbm %s1, %s63
    %s65 = scalar_lea.vmem [#allocation2], 3
    %s66 = scalar_lea.sflag [#allocation3], 3
    // Predicated region
    $region14: #{tpu_custom_call.1} parent=1 // pred_check
      _
    $region15: #{tpu_custom_call.1} parent=1 // pred_check_branch
      %68 = sbr.rel target = $region17
    $region16: #{tpu_custom_call.1} parent=1 // pred_region
      %69 = sst [smem:[#allocation10]] [#allocation17]
      %70 = sst [smem:[#allocation11]] [#allocation16]
    $region17: #{tpu_custom_call.1} parent=1 // pred_fallthru
      _
    %72 = shalt.err (0)
    %s74 = sshll.u32 %s65, 4
    %s75 = int_to_ptr.vmem [resolvable:$true] %s74
    %77 = dma.hbm_to_vmem [thread:$0]  %s64, 16, %s75, %s66
    %s78 = sadd.s32 %s12, 4
    %s79 = sld [smem:[#allocation5 + %s78]]
    %s80 = smul.addr %s79, 16
    %s81 = scalar_lea.hbm %s1, %s80
    %s82 = scalar_lea.vmem [#allocation2], 4
    %s83 = scalar_lea.sflag [#allocation3], 4
    // Predicated region
    $region18: #{tpu_custom_call.1} parent=1 // pred_check
      _
    $region19: #{tpu_custom_call.1} parent=1 // pred_check_branch
      %85 = sbr.rel target = $region21
    $region20: #{tpu_custom_call.1} parent=1 // pred_region
      %86 = sst [smem:[#allocation10]] [#allocation19]
      %87 = sst [smem:[#allocation11]] [#allocation18]
    $region21: #{tpu_custom_call.1} parent=1 // pred_fallthru
      _
    %89 = shalt.err (0)
    %s91 = sshll.u32 %s82, 4
    %s92 = int_to_ptr.vmem [resolvable:$true] %s91
    %94 = dma.hbm_to_vmem [thread:$0]  %s81, 16, %s92, %s83
    %s95 = sadd.s32 %s12, 5
    %s96 = sld [smem:[#allocation5 + %s95]]
    %s97 = smul.addr %s96, 16
    %s98 = scalar_lea.hbm %s1, %s97
    %s99 = scalar_lea.vmem [#allocation2], 5
    %s100 = scalar_lea.sflag [#allocation3], 5
    // Predicated region
    $region22: #{tpu_custom_call.1} parent=1 // pred_check
      _
    $region23: #{tpu_custom_call.1} parent=1 // pred_check_branch
      %102 = sbr.rel target = $region25
    $region24: #{tpu_custom_call.1} parent=1 // pred_region
      %103 = sst [smem:[#allocation10]] [#allocation21]
      %104 = sst [smem:[#allocation11]] [#allocation20]
    $region25: #{tpu_custom_call.1} parent=1 // pred_fallthru
      _
    %106 = shalt.err (0)
    %s108 = sshll.u32 %s99, 4
    %s109 = int_to_ptr.vmem [resolvable:$true] %s108
    %111 = dma.hbm_to_vmem [thread:$0]  %s98, 16, %s109, %s100
    %s112 = sadd.s32 %s12, 6
    %s113 = sld [smem:[#allocation5 + %s112]]
    %s114 = smul.addr %s113, 16
    %s115 = scalar_lea.hbm %s1, %s114
    %s116 = scalar_lea.vmem [#allocation2], 6
    %s117 = scalar_lea.sflag [#allocation3], 6
    // Predicated region
    $region26: #{tpu_custom_call.1} parent=1 // pred_check
      _
    $region27: #{tpu_custom_call.1} parent=1 // pred_check_branch
      %119 = sbr.rel target = $region29
    $region28: #{tpu_custom_call.1} parent=1 // pred_region
      %120 = sst [smem:[#allocation10]] [#allocation23]
      %121 = sst [smem:[#allocation11]] [#allocation22]
    $region29: #{tpu_custom_call.1} parent=1 // pred_fallthru
      _
    %123 = shalt.err (0)
    %s125 = sshll.u32 %s116, 4
    %s126 = int_to_ptr.vmem [resolvable:$true] %s125
    %128 = dma.hbm_to_vmem [thread:$0]  %s115, 16, %s126, %s117
    %s129 = sadd.s32 %s12, 7
    %s130 = sld [smem:[#allocation5 + %s129]]
    %s131 = smul.addr %s130, 16
    %s132 = scalar_lea.hbm %s1, %s131
    %s133 = scalar_lea.vmem [#allocation2], 7
    %s134 = scalar_lea.sflag [#allocation3], 7
    // Predicated region
    $region30: #{tpu_custom_call.1} parent=1 // pred_check
      _
    $region31: #{tpu_custom_call.1} parent=1 // pred_check_branch
      %136 = sbr.rel target = $region33
    $region32: #{tpu_custom_call.1} parent=1 // pred_region
      %137 = sst [smem:[#allocation10]] [#allocation25]
      %138 = sst [smem:[#allocation11]] [#allocation24]
    $region33: #{tpu_custom_call.1} parent=1 // pred_fallthru
      _
    %140 = shalt.err (0)
    %s142 = sshll.u32 %s133, 4
    %s143 = int_to_ptr.vmem [resolvable:$true] %s142
    %145 = dma.hbm_to_vmem [thread:$0]  %s132, 16, %s143, %s134
    %s146 = sadd.s32 %s12, 8
    %s147 = sld [smem:[#allocation5 + %s146]]
    %s148 = smul.addr %s147, 16
    %s149 = scalar_lea.hbm %s1, %s148
    %s150 = scalar_lea.vmem [#allocation2], 8
    %s151 = scalar_lea.sflag [#allocation3], 8
    // Predicated region
    $region34: #{tpu_custom_call.1} parent=1 // pred_check
      _
    $region35: #{tpu_custom_call.1} parent=1 // pred_check_branch
      %153 = sbr.rel target = $region37
    $region36: #{tpu_custom_call.1} parent=1 // pred_region
      %154 = sst [smem:[#allocation10]] [#allocation27]
      %155 = sst [smem:[#allocation11]] [#allocation26]
    $region37: #{tpu_custom_call.1} parent=1 // pred_fallthru
      _
    %157 = shalt.err (0)
    %s159 = sshll.u32 %s150, 4
    %s160 = int_to_ptr.vmem [resolvable:$true] %s159
    %162 = dma.hbm_to_vmem [thread:$0]  %s149, 16, %s160, %s151
    %s163 = sadd.s32 %s12, 9
    %s164 = sld [smem:[#allocation5 + %s163]]
    %s165 = smul.addr %s164, 16
    %s166 = scalar_lea.hbm %s1, %s165
    %s167 = scalar_lea.vmem [#allocation2], 9
    %s168 = scalar_lea.sflag [#allocation3], 9
    // Predicated region
    $region38: #{tpu_custom_call.1} parent=1 // pred_check
      _
    $region39: #{tpu_custom_call.1} parent=1 // pred_check_branch
      %170 = sbr.rel target = $region41
    $region40: #{tpu_custom_call.1} parent=1 // pred_region
      %171 = sst [smem:[#allocation10]] [#allocation29]
      %172 = sst [smem:[#allocation11]] [#allocation28]
    $region41: #{tpu_custom_call.1} parent=1 // pred_fallthru
      _
    %174 = shalt.err (0)
    %s176 = sshll.u32 %s167, 4
    %s177 = int_to_ptr.vmem [resolvable:$true] %s176
    %179 = dma.hbm_to_vmem [thread:$0]  %s166, 16, %s177, %s168
    %s180 = sadd.s32 %s12, 10
    %s181 = sld [smem:[#allocation5 + %s180]]
    %s182 = smul.addr %s181, 16
    %s183 = scalar_lea.hbm %s1, %s182
    %s184 = scalar_lea.vmem [#allocation2], 10
    %s185 = scalar_lea.sflag [#allocation3], 10
    // Predicated region
    $region42: #{tpu_custom_call.1} parent=1 // pred_check
      _
    $region43: #{tpu_custom_call.1} parent=1 // pred_check_branch
      %187 = sbr.rel target = $region45
    $region44: #{tpu_custom_call.1} parent=1 // pred_region
      %188 = sst [smem:[#allocation10]] [#allocation31]
      %189 = sst [smem:[#allocation11]] [#allocation30]
    $region45: #{tpu_custom_call.1} parent=1 // pred_fallthru
      _
    %191 = shalt.err (0)
    %s193 = sshll.u32 %s184, 4
    %s194 = int_to_ptr.vmem [resolvable:$true] %s193
    %196 = dma.hbm_to_vmem [thread:$0]  %s183, 16, %s194, %s185
    %s197 = sadd.s32 %s12, 11
    %s198 = sld [smem:[#allocation5 + %s197]]
    %s199 = smul.addr %s198, 16
    %s200 = scalar_lea.hbm %s1, %s199
    %s201 = scalar_lea.vmem [#allocation2], 11
    %s202 = scalar_lea.sflag [#allocation3], 11
    // Predicated region
    $region46: #{tpu_custom_call.1} parent=1 // pred_check
      _
    $region47: #{tpu_custom_call.1} parent=1 // pred_check_branch
      %204 = sbr.rel target = $region49
    $region48: #{tpu_custom_call.1} parent=1 // pred_region
      %205 = sst [smem:[#allocation10]] [#allocation33]
      %206 = sst [smem:[#allocation11]] [#allocation32]
    $region49: #{tpu_custom_call.1} parent=1 // pred_fallthru
      _
    %208 = shalt.err (0)
    %s210 = sshll.u32 %s201, 4
    %s211 = int_to_ptr.vmem [resolvable:$true] %s210
    %213 = dma.hbm_to_vmem [thread:$0]  %s200, 16, %s211, %s202
    %s214 = sadd.s32 %s12, 12
    %s215 = sld [smem:[#allocation5 + %s214]]
    %s216 = smul.addr %s215, 16
    %s217 = scalar_lea.hbm %s1, %s216
    %s218 = scalar_lea.vmem [#allocation2], 12
    %s219 = scalar_lea.sflag [#allocation3], 12
    // Predicated region
    $region50: #{tpu_custom_call.1} parent=1 // pred_check
      _
    $region51: #{tpu_custom_call.1} parent=1 // pred_check_branch
      %221 = sbr.rel target = $region53
    $region52: #{tpu_custom_call.1} parent=1 // pred_region
      %222 = sst [smem:[#allocation10]] [#allocation35]
      %223 = sst [smem:[#allocation11]] [#allocation34]
    $region53: #{tpu_custom_call.1} parent=1 // pred_fallthru
      _
    %225 = shalt.err (0)
    %s227 = sshll.u32 %s218, 4
    %s228 = int_to_ptr.vmem [resolvable:$true] %s227
    %230 = dma.hbm_to_vmem [thread:$0]  %s217, 16, %s228, %s219
    %s231 = sadd.s32 %s12, 13
    %s232 = sld [smem:[#allocation5 + %s231]]
    %s233 = smul.addr %s232, 16
    %s234 = scalar_lea.hbm %s1, %s233
    %s235 = scalar_lea.vmem [#allocation2], 13
    %s236 = scalar_lea.sflag [#allocation3], 13
    // Predicated region
    $region54: #{tpu_custom_call.1} parent=1 // pred_check
      _
    $region55: #{tpu_custom_call.1} parent=1 // pred_check_branch
      %238 = sbr.rel target = $region57
    $region56: #{tpu_custom_call.1} parent=1 // pred_region
      %239 = sst [smem:[#allocation10]] [#allocation37]
      %240 = sst [smem:[#allocation11]] [#allocation36]
    $region57: #{tpu_custom_call.1} parent=1 // pred_fallthru
      _
    %242 = shalt.err (0)
    %s244 = sshll.u32 %s235, 4
    %s245 = int_to_ptr.vmem [resolvable:$true] %s244
    %247 = dma.hbm_to_vmem [thread:$0]  %s234, 16, %s245, %s236
    %s248 = sadd.s32 %s12, 14
    %s249 = sld [smem:[#allocation5 + %s248]]
    %s250 = smul.addr %s249, 16
    %s251 = scalar_lea.hbm %s1, %s250
    %s252 = scalar_lea.vmem [#allocation2], 14
    %s253 = scalar_lea.sflag [#allocation3], 14
    // Predicated region
    $region58: #{tpu_custom_call.1} parent=1 // pred_check
      _
    $region59: #{tpu_custom_call.1} parent=1 // pred_check_branch
      %255 = sbr.rel target = $region61
    $region60: #{tpu_custom_call.1} parent=1 // pred_region
      %256 = sst [smem:[#allocation10]] [#allocation39]
      %257 = sst [smem:[#allocation11]] [#allocation38]
    $region61: #{tpu_custom_call.1} parent=1 // pred_fallthru
      _
    %259 = shalt.err (0)
    %s261 = sshll.u32 %s252, 4
    %s262 = int_to_ptr.vmem [resolvable:$true] %s261
    %264 = dma.hbm_to_vmem [thread:$0]  %s251, 16, %s262, %s253
    %s265 = sadd.s32 %s12, 15
    %s266 = sld [smem:[#allocation5 + %s265]]
    %s267 = smul.addr %s266, 16
    %s268 = scalar_lea.hbm %s1, %s267
    %s269 = scalar_lea.vmem [#allocation2], 15
    %s270 = scalar_lea.sflag [#allocation3], 15
    // Predicated region
    $region62: #{tpu_custom_call.1} parent=1 // pred_check
      _
    $region63: #{tpu_custom_call.1} parent=1 // pred_check_branch
      %272 = sbr.rel target = $region65
    $region64: #{tpu_custom_call.1} parent=1 // pred_region
      %273 = sst [smem:[#allocation10]] [#allocation41]
      %274 = sst [smem:[#allocation11]] [#allocation40]
    $region65: #{tpu_custom_call.1} parent=1 // pred_fallthru
      _
    %276 = shalt.err (0)
    %s278 = sshll.u32 %s269, 4
    %s279 = int_to_ptr.vmem [resolvable:$true] %s278
    %281 = dma.hbm_to_vmem [thread:$0]  %s268, 16, %s279, %s270
    %s282 = sadd.s32 %s12, 16
    %s283 = sld [smem:[#allocation5 + %s282]]
    %s284 = smul.addr %s283, 16
    %s285 = scalar_lea.hbm %s1, %s284
    %s286 = scalar_lea.vmem [#allocation2], 16
    %s287 = scalar_lea.sflag [#allocation3], 16
    // Predicated region
    $region66: #{tpu_custom_call.1} parent=1 // pred_check
      _
    $region67: #{tpu_custom_call.1} parent=1 // pred_check_branch
      %289 = sbr.rel target = $region69
    $region68: #{tpu_custom_call.1} parent=1 // pred_region
      %290 = sst [smem:[#allocation10]] [#allocation43]
      %291 = sst [smem:[#allocation11]] [#allocation42]
    $region69: #{tpu_custom_call.1} parent=1 // pred_fallthru
      _
    %293 = shalt.err (0)
    %s295 = sshll.u32 %s286, 4
    %s296 = int_to_ptr.vmem [resolvable:$true] %s295
    %298 = dma.hbm_to_vmem [thread:$0]  %s285, 16, %s296, %s287
    %s299 = sadd.s32 %s12, 17
    %s300 = sld [smem:[#allocation5 + %s299]]
    %s301 = smul.addr %s300, 16
    %s302 = scalar_lea.hbm %s1, %s301
    %s303 = scalar_lea.vmem [#allocation2], 17
    %s304 = scalar_lea.sflag [#allocation3], 17
    // Predicated region
    $region70: #{tpu_custom_call.1} parent=1 // pred_check
      _
    $region71: #{tpu_custom_call.1} parent=1 // pred_check_branch
      %306 = sbr.rel target = $region73
    $region72: #{tpu_custom_call.1} parent=1 // pred_region
      %307 = sst [smem:[#allocation10]] [#allocation45]
      %308 = sst [smem:[#allocation11]] [#allocation44]
    $region73: #{tpu_custom_call.1} parent=1 // pred_fallthru
      _
    %310 = shalt.err (0)
    %s312 = sshll.u32 %s303, 4
    %s313 = int_to_ptr.vmem [resolvable:$true] %s312
    %315 = dma.hbm_to_vmem [thread:$0]  %s302, 16, %s313, %s304
    %s316 = sadd.s32 %s12, 18
    %s317 = sld [smem:[#allocation5 + %s316]]
    %s318 = smul.addr %s317, 16
    %s319 = scalar_lea.hbm %s1, %s318
    %s320 = scalar_lea.vmem [#allocation2], 18
    %s321 = scalar_lea.sflag [#allocation3], 18
    // Predicated region
    $region74: #{tpu_custom_call.1} parent=1 // pred_check
      _
    $region75: #{tpu_custom_call.1} parent=1 // pred_check_branch
      %323 = sbr.rel target = $region77
    $region76: #{tpu_custom_call.1} parent=1 // pred_region
      %324 = sst [smem:[#allocation10]] [#allocation47]
      %325 = sst [smem:[#allocation11]] [#allocation46]
    $region77: #{tpu_custom_call.1} parent=1 // pred_fallthru
      _
    %327 = shalt.err (0)
    %s329 = sshll.u32 %s320, 4
    %s330 = int_to_ptr.vmem [resolvable:$true] %s329
    %332 = dma.hbm_to_vmem [thread:$0]  %s319, 16, %s330, %s321
    %s333 = sadd.s32 %s12, 19
    %s334 = sld [smem:[#allocation5 + %s333]]
    %s335 = smul.addr %s334, 16
    %s336 = scalar_lea.hbm %s1, %s335
    %s337 = scalar_lea.vmem [#allocation2], 19
    %s338 = scalar_lea.sflag [#allocation3], 19
    // Predicated region
    $region78: #{tpu_custom_call.1} parent=1 // pred_check
      _
    $region79: #{tpu_custom_call.1} parent=1 // pred_check_branch
      %340 = sbr.rel target = $region81
    $region80: #{tpu_custom_call.1} parent=1 // pred_region
      %341 = sst [smem:[#allocation10]] [#allocation49]
      %342 = sst [smem:[#allocation11]] [#allocation48]
    $region81: #{tpu_custom_call.1} parent=1 // pred_fallthru
      _
    %344 = shalt.err (0)
    %s346 = sshll.u32 %s337, 4
    %s347 = int_to_ptr.vmem [resolvable:$true] %s346
    %349 = dma.hbm_to_vmem [thread:$0]  %s336, 16, %s347, %s338
    %s350 = sadd.s32 %s12, 20
    %s351 = sld [smem:[#allocation5 + %s350]]
    %s352 = smul.addr %s351, 16
    %s353 = scalar_lea.hbm %s1, %s352
    %s354 = scalar_lea.vmem [#allocation2], 20
    %s355 = scalar_lea.sflag [#allocation3], 20
    // Predicated region
    $region82: #{tpu_custom_call.1} parent=1 // pred_check
      _
    $region83: #{tpu_custom_call.1} parent=1 // pred_check_branch
      %357 = sbr.rel target = $region85
    $region84: #{tpu_custom_call.1} parent=1 // pred_region
      %358 = sst [smem:[#allocation10]] [#allocation51]
      %359 = sst [smem:[#allocation11]] [#allocation50]
    $region85: #{tpu_custom_call.1} parent=1 // pred_fallthru
      _
    %361 = shalt.err (0)
    %s363 = sshll.u32 %s354, 4
    %s364 = int_to_ptr.vmem [resolvable:$true] %s363
    %366 = dma.hbm_to_vmem [thread:$0]  %s353, 16, %s364, %s355
    %s367 = sadd.s32 %s12, 21
    %s368 = sld [smem:[#allocation5 + %s367]]
    %s369 = smul.addr %s368, 16
    %s370 = scalar_lea.hbm %s1, %s369
    %s371 = scalar_lea.vmem [#allocation2], 21
    %s372 = scalar_lea.sflag [#allocation3], 21
    // Predicated region
    $region86: #{tpu_custom_call.1} parent=1 // pred_check
      _
    $region87: #{tpu_custom_call.1} parent=1 // pred_check_branch
      %374 = sbr.rel target = $region89
    $region88: #{tpu_custom_call.1} parent=1 // pred_region
      %375 = sst [smem:[#allocation10]] [#allocation53]
      %376 = sst [smem:[#allocation11]] [#allocation52]
    $region89: #{tpu_custom_call.1} parent=1 // pred_fallthru
      _
    %378 = shalt.err (0)
    %s380 = sshll.u32 %s371, 4
    %s381 = int_to_ptr.vmem [resolvable:$true] %s380
    %383 = dma.hbm_to_vmem [thread:$0]  %s370, 16, %s381, %s372
    %s384 = sadd.s32 %s12, 22
    %s385 = sld [smem:[#allocation5 + %s384]]
    %s386 = smul.addr %s385, 16
    %s387 = scalar_lea.hbm %s1, %s386
    %s388 = scalar_lea.vmem [#allocation2], 22
    %s389 = scalar_lea.sflag [#allocation3], 22
    // Predicated region
    $region90: #{tpu_custom_call.1} parent=1 // pred_check
      _
    $region91: #{tpu_custom_call.1} parent=1 // pred_check_branch
      %391 = sbr.rel target = $region93
    $region92: #{tpu_custom_call.1} parent=1 // pred_region
      %392 = sst [smem:[#allocation10]] [#allocation55]
      %393 = sst [smem:[#allocation11]] [#allocation54]
    $region93: #{tpu_custom_call.1} parent=1 // pred_fallthru
      _
    %395 = shalt.err (0)
    %s397 = sshll.u32 %s388, 4
    %s398 = int_to_ptr.vmem [resolvable:$true] %s397
    %400 = dma.hbm_to_vmem [thread:$0]  %s387, 16, %s398, %s389
    %s401 = sadd.s32 %s12, 23
    %s402 = sld [smem:[#allocation5 + %s401]]
    %s403 = smul.addr %s402, 16
    %s404 = scalar_lea.hbm %s1, %s403
    %s405 = scalar_lea.vmem [#allocation2], 23
    %s406 = scalar_lea.sflag [#allocation3], 23
    // Predicated region
    $region94: #{tpu_custom_call.1} parent=1 // pred_check
      _
    $region95: #{tpu_custom_call.1} parent=1 // pred_check_branch
      %408 = sbr.rel target = $region97
    $region96: #{tpu_custom_call.1} parent=1 // pred_region
      %409 = sst [smem:[#allocation10]] [#allocation57]
      %410 = sst [smem:[#allocation11]] [#allocation56]
    $region97: #{tpu_custom_call.1} parent=1 // pred_fallthru
      _
    %412 = shalt.err (0)
    %s414 = sshll.u32 %s405, 4
    %s415 = int_to_ptr.vmem [resolvable:$true] %s414
    %417 = dma.hbm_to_vmem [thread:$0]  %s404, 16, %s415, %s406
    %s418 = sadd.s32 %s12, 24
    %s419 = sld [smem:[#allocation5 + %s418]]
    %s420 = smul.addr %s419, 16
    %s421 = scalar_lea.hbm %s1, %s420
    %s422 = scalar_lea.vmem [#allocation2], 24
    %s423 = scalar_lea.sflag [#allocation3], 24
    // Predicated region
    $region98: #{tpu_custom_call.1} parent=1 // pred_check
      _
    $region99: #{tpu_custom_call.1} parent=1 // pred_check_branch
      %425 = sbr.rel target = $region101
    $region100: #{tpu_custom_call.1} parent=1 // pred_region
      %426 = sst [smem:[#allocation10]] [#allocation59]
      %427 = sst [smem:[#allocation11]] [#allocation58]
    $region101: #{tpu_custom_call.1} parent=1 // pred_fallthru
      _
    %429 = shalt.err (0)
    %s431 = sshll.u32 %s422, 4
    %s432 = int_to_ptr.vmem [resolvable:$true] %s431
    %434 = dma.hbm_to_vmem [thread:$0]  %s421, 16, %s432, %s423
    %s435 = sadd.s32 %s12, 25
    %s436 = sld [smem:[#allocation5 + %s435]]
    %s437 = smul.addr %s436, 16
    %s438 = scalar_lea.hbm %s1, %s437
    %s439 = scalar_lea.vmem [#allocation2], 25
    %s440 = scalar_lea.sflag [#allocation3], 25
    // Predicated region
    $region102: #{tpu_custom_call.1} parent=1 // pred_check
      _
    $region103: #{tpu_custom_call.1} parent=1 // pred_check_branch
      %442 = sbr.rel target = $region105
    $region104: #{tpu_custom_call.1} parent=1 // pred_region
      %443 = sst [smem:[#allocation10]] [#allocation61]
      %444 = sst [smem:[#allocation11]] [#allocation60]
    $region105: #{tpu_custom_call.1} parent=1 // pred_fallthru
      _
    %446 = shalt.err (0)
    %s448 = sshll.u32 %s439, 4
    %s449 = int_to_ptr.vmem [resolvable:$true] %s448
    %451 = dma.hbm_to_vmem [thread:$0]  %s438, 16, %s449, %s440
    %s452 = sadd.s32 %s12, 26
    %s453 = sld [smem:[#allocation5 + %s452]]
    %s454 = smul.addr %s453, 16
    %s455 = scalar_lea.hbm %s1, %s454
    %s456 = scalar_lea.vmem [#allocation2], 26
    %s457 = scalar_lea.sflag [#allocation3], 26
    // Predicated region
    $region106: #{tpu_custom_call.1} parent=1 // pred_check
      _
    $region107: #{tpu_custom_call.1} parent=1 // pred_check_branch
      %459 = sbr.rel target = $region109
    $region108: #{tpu_custom_call.1} parent=1 // pred_region
      %460 = sst [smem:[#allocation10]] [#allocation63]
      %461 = sst [smem:[#allocation11]] [#allocation62]
    $region109: #{tpu_custom_call.1} parent=1 // pred_fallthru
      _
    %463 = shalt.err (0)
    %s465 = sshll.u32 %s456, 4
    %s466 = int_to_ptr.vmem [resolvable:$true] %s465
    %468 = dma.hbm_to_vmem [thread:$0]  %s455, 16, %s466, %s457
    %s469 = sadd.s32 %s12, 27
    %s470 = sld [smem:[#allocation5 + %s469]]
    %s471 = smul.addr %s470, 16
    %s472 = scalar_lea.hbm %s1, %s471
    %s473 = scalar_lea.vmem [#allocation2], 27
    %s474 = scalar_lea.sflag [#allocation3], 27
    // Predicated region
    $region110: #{tpu_custom_call.1} parent=1 // pred_check
      _
    $region111: #{tpu_custom_call.1} parent=1 // pred_check_branch
      %476 = sbr.rel target = $region113
    $region112: #{tpu_custom_call.1} parent=1 // pred_region
      %477 = sst [smem:[#allocation10]] [#allocation65]
      %478 = sst [smem:[#allocation11]] [#allocation64]
    $region113: #{tpu_custom_call.1} parent=1 // pred_fallthru
      _
    %480 = shalt.err (0)
    %s482 = sshll.u32 %s473, 4
    %s483 = int_to_ptr.vmem [resolvable:$true] %s482
    %485 = dma.hbm_to_vmem [thread:$0]  %s472, 16, %s483, %s474
    %s486 = sadd.s32 %s12, 28
    %s487 = sld [smem:[#allocation5 + %s486]]
    %s488 = smul.addr %s487, 16
    %s489 = scalar_lea.hbm %s1, %s488
    %s490 = scalar_lea.vmem [#allocation2], 28
    %s491 = scalar_lea.sflag [#allocation3], 28
    // Predicated region
    $region114: #{tpu_custom_call.1} parent=1 // pred_check
      _
    $region115: #{tpu_custom_call.1} parent=1 // pred_check_branch
      %493 = sbr.rel target = $region117
    $region116: #{tpu_custom_call.1} parent=1 // pred_region
      %494 = sst [smem:[#allocation10]] [#allocation67]
      %495 = sst [smem:[#allocation11]] [#allocation66]
    $region117: #{tpu_custom_call.1} parent=1 // pred_fallthru
      _
    %497 = shalt.err (0)
    %s499 = sshll.u32 %s490, 4
    %s500 = int_to_ptr.vmem [resolvable:$true] %s499
    %502 = dma.hbm_to_vmem [thread:$0]  %s489, 16, %s500, %s491
    %s503 = sadd.s32 %s12, 29
    %s504 = sld [smem:[#allocation5 + %s503]]
    %s505 = smul.addr %s504, 16
    %s506 = scalar_lea.hbm %s1, %s505
    %s507 = scalar_lea.vmem [#allocation2], 29
    %s508 = scalar_lea.sflag [#allocation3], 29
    // Predicated region
    $region118: #{tpu_custom_call.1} parent=1 // pred_check
      _
    $region119: #{tpu_custom_call.1} parent=1 // pred_check_branch
      %510 = sbr.rel target = $region121
    $region120: #{tpu_custom_call.1} parent=1 // pred_region
      %511 = sst [smem:[#allocation10]] [#allocation69]
      %512 = sst [smem:[#allocation11]] [#allocation68]
    $region121: #{tpu_custom_call.1} parent=1 // pred_fallthru
      _
    %514 = shalt.err (0)
    %s516 = sshll.u32 %s507, 4
    %s517 = int_to_ptr.vmem [resolvable:$true] %s516
    %519 = dma.hbm_to_vmem [thread:$0]  %s506, 16, %s517, %s508
    %s520 = sadd.s32 %s12, 30
    %s521 = sld [smem:[#allocation5 + %s520]]
    %s522 = smul.addr %s521, 16
    %s523 = scalar_lea.hbm %s1, %s522
    %s524 = scalar_lea.vmem [#allocation2], 30
    %s525 = scalar_lea.sflag [#allocation3], 30
    // Predicated region
    $region122: #{tpu_custom_call.1} parent=1 // pred_check
      _
    $region123: #{tpu_custom_call.1} parent=1 // pred_check_branch
      %527 = sbr.rel target = $region125
    $region124: #{tpu_custom_call.1} parent=1 // pred_region
      %528 = sst [smem:[#allocation10]] [#allocation71]
      %529 = sst [smem:[#allocation11]] [#allocation70]
    $region125: #{tpu_custom_call.1} parent=1 // pred_fallthru
      _
    %531 = shalt.err (0)
    %s533 = sshll.u32 %s524, 4
    %s534 = int_to_ptr.vmem [resolvable:$true] %s533
    %536 = dma.hbm_to_vmem [thread:$0]  %s523, 16, %s534, %s525
    %s537 = sadd.s32 %s12, 31
    %s538 = sld [smem:[#allocation5 + %s537]]
    %s539 = smul.addr %s538, 16
    %s540 = scalar_lea.hbm %s1, %s539
    %s541 = scalar_lea.vmem [#allocation2], 31
    %s542 = scalar_lea.sflag [#allocation3], 31
    // Predicated region
    $region126: #{tpu_custom_call.1} parent=1 // pred_check
      _
    $region127: #{tpu_custom_call.1} parent=1 // pred_check_branch
      %544 = sbr.rel target = $region129
    $region128: #{tpu_custom_call.1} parent=1 // pred_region
      %545 = sst [smem:[#allocation10]] [#allocation73]
      %546 = sst [smem:[#allocation11]] [#allocation72]
    $region129: #{tpu_custom_call.1} parent=1 // pred_fallthru
      _
    %548 = shalt.err (0)
    %s550 = sshll.u32 %s541, 4
    %s551 = int_to_ptr.vmem [resolvable:$true] %s550
    %553 = dma.hbm_to_vmem [thread:$0]  %s540, 16, %s551, %s542
    %s554 = sld [smem:[#allocation5 + %s12]]
    %s555 = smul.u32 1, 1
    %s556 = sshll.u32 %s555, 4
    %557 = dma.done [#allocation3], %s556
    %s558 = sld [smem:[#allocation5 + %s27]]
    %s559 = sshll.u32 %s555, 4
    %560 = dma.done %s32, %s559
    %s561 = sld [smem:[#allocation5 + %s44]]
    %s562 = sshll.u32 %s555, 4
    %563 = dma.done %s49, %s562
    %s564 = sld [smem:[#allocation5 + %s61]]
    %s565 = sshll.u32 %s555, 4
    %566 = dma.done %s66, %s565
    %s567 = sld [smem:[#allocation5 + %s78]]
    %s568 = sshll.u32 %s555, 4
    %569 = dma.done %s83, %s568
    %s570 = sld [smem:[#allocation5 + %s95]]
    %s571 = sshll.u32 %s555, 4
    %572 = dma.done %s100, %s571
    %s573 = sld [smem:[#allocation5 + %s112]]
    %s574 = sshll.u32 %s555, 4
    %575 = dma.done %s117, %s574
    %s576 = sld [smem:[#allocation5 + %s129]]
    %s577 = sshll.u32 %s555, 4
    %578 = dma.done %s134, %s577
    %s579 = sld [smem:[#allocation5 + %s146]]
    %s580 = sshll.u32 %s555, 4
    %581 = dma.done %s151, %s580
    %s582 = sld [smem:[#allocation5 + %s163]]
    %s583 = sshll.u32 %s555, 4
    %584 = dma.done %s168, %s583
    %s585 = sld [smem:[#allocation5 + %s180]]
    %s586 = sshll.u32 %s555, 4
    %587 = dma.done %s185, %s586
    %s588 = sld [smem:[#allocation5 + %s197]]
    %s589 = sshll.u32 %s555, 4
    %590 = dma.done %s202, %s589
    %s591 = sld [smem:[#allocation5 + %s214]]
    %s592 = sshll.u32 %s555, 4
    %593 = dma.done %s219, %s592
    %s594 = sld [smem:[#allocation5 + %s231]]
    %s595 = sshll.u32 %s555, 4
    %596 = dma.done %s236, %s595
    %s597 = sld [smem:[#allocation5 + %s248]]
    %s598 = sshll.u32 %s555, 4
    %599 = dma.done %s253, %s598
    %s600 = sld [smem:[#allocation5 + %s265]]
    %s601 = sshll.u32 %s555, 4
    %602 = dma.done %s270, %s601
    %s603 = sld [smem:[#allocation5 + %s282]]
    %s604 = sshll.u32 %s555, 4
    %605 = dma.done %s287, %s604
    %s606 = sld [smem:[#allocation5 + %s299]]
    %s607 = sshll.u32 %s555, 4
    %608 = dma.done %s304, %s607
    %s609 = sld [smem:[#allocation5 + %s316]]
    %s610 = sshll.u32 %s555, 4
    %611 = dma.done %s321, %s610
    %s612 = sld [smem:[#allocation5 + %s333]]
    %s613 = sshll.u32 %s555, 4
    %614 = dma.done %s338, %s613
    %s615 = sld [smem:[#allocation5 + %s350]]
    %s616 = sshll.u32 %s555, 4
    %617 = dma.done %s355, %s616
    %s618 = sld [smem:[#allocation5 + %s367]]
    %s619 = sshll.u32 %s555, 4
    %620 = dma.done %s372, %s619
    %s621 = sld [smem:[#allocation5 + %s384]]
    %s622 = sshll.u32 %s555, 4
    %623 = dma.done %s389, %s622
    %s624 = sld [smem:[#allocation5 + %s401]]
    %s625 = sshll.u32 %s555, 4
    %626 = dma.done %s406, %s625
    %s627 = sld [smem:[#allocation5 + %s418]]
    %s628 = sshll.u32 %s555, 4
    %629 = dma.done %s423, %s628
    %s630 = sld [smem:[#allocation5 + %s435]]
    %s631 = sshll.u32 %s555, 4
    %632 = dma.done %s440, %s631
    %s633 = sld [smem:[#allocation5 + %s452]]
    %s634 = sshll.u32 %s555, 4
    %635 = dma.done %s457, %s634
    %s636 = sld [smem:[#allocation5 + %s469]]
    %s637 = sshll.u32 %s555, 4
    %638 = dma.done %s474, %s637
    %s639 = sld [smem:[#allocation5 + %s486]]
    %s640 = sshll.u32 %s555, 4
    %641 = dma.done %s491, %s640
    %s642 = sld [smem:[#allocation5 + %s503]]
    %s643 = sshll.u32 %s555, 4
    %644 = dma.done %s508, %s643
    %s645 = sld [smem:[#allocation5 + %s520]]
    %s646 = sshll.u32 %s555, 4
    %647 = dma.done %s525, %s646
    %s648 = sld [smem:[#allocation5 + %s537]]
    %s649 = sshll.u32 %s555, 4
    %650 = dma.done %s542, %s649
    %v651 = vld [vmem:[#allocation2] sm:$0xff]
    %v652 = vld [vmem:[#allocation2 + $0x8] sm:$0xff]
    %v653 = vld [vmem:[#allocation2 + $0x10] sm:$0xff]
    %v654 = vld [vmem:[#allocation2 + $0x18] sm:$0xff]
    %655 = vst [vmem:[#allocation6] sm:$0xff] %v651
    %656 = vst [vmem:[#allocation6 + $0x8] sm:$0xff] %v652
    %657 = vst [vmem:[#allocation6 + $0x10] sm:$0xff] %v653
    %658 = vst [vmem:[#allocation6 + $0x18] sm:$0xff] %v654
    // Predicated region
    $region130: #{tpu_custom_call.1} parent=1 // pred_check
      _
    $region131: #{tpu_custom_call.1} parent=1 // pred_check_branch
      %660 = sbr.rel (0) target = $region133
    $region132: #{tpu_custom_call.1} parent=1 // pred_region
      %s662 = ssub.s32 512, 512
      %663 = vsyncadd [#allocation7], %s662
      %s664 = sshll.u32 [#allocation6], 4
      %s665 = int_to_ptr.vmem [resolvable:$true] %s664
      %670 = dma.vmem_to_hbm [thread:$0]  %s665, 512, %s2, [#allocation7], 128, 128, 8
    $region133: #{tpu_custom_call.1} parent=1 // pred_fallthru
      _
    // Predicated region
    $region134: #{tpu_custom_call.1} parent=1 // pred_check
      _
    $region135: #{tpu_custom_call.1} parent=1 // pred_check_branch
      %672 = sbr.rel (0) target = $region137
    $region136: #{tpu_custom_call.1} parent=1 // pred_region
      %673 = dma.done [#allocation7], 512
    $region137: #{tpu_custom_call.1} parent=1 // pred_fallthru
      _
    %674 = vsyncpa [#allocation7], 1
  %675 = vsyncmov [#allocation3]
  %s676 = vpop.sfrf %675
  %p677 = scmp.eq.s32.totalorder %s676, 0
  %p678 = pneg %p677
  %680 = shalt.err (%p678)
  %s681 = scalar_lea.sflag [#allocation3], 1
  %682 = vsyncmov %s681
  %s683 = vpop.sfrf %682
  %p684 = scmp.eq.s32.totalorder %s683, 0
  %p685 = pneg %p684
  %687 = shalt.err (%p685)
  %s688 = scalar_lea.sflag [#allocation3], 2
  %689 = vsyncmov %s688
  %s690 = vpop.sfrf %689
  %p691 = scmp.eq.s32.totalorder %s690, 0
  %p692 = pneg %p691
  %694 = shalt.err (%p692)
  %s695 = scalar_lea.sflag [#allocation3], 3
  %696 = vsyncmov %s695
  %s697 = vpop.sfrf %696
  %p698 = scmp.eq.s32.totalorder %s697, 0
  %p699 = pneg %p698
  %701 = shalt.err (%p699)
  %s702 = scalar_lea.sflag [#allocation3], 4
  %703 = vsyncmov %s702
  %s704 = vpop.sfrf %703
  %p705 = scmp.eq.s32.totalorder %s704, 0
  %p706 = pneg %p705
  %708 = shalt.err (%p706)
  %s709 = scalar_lea.sflag [#allocation3], 5
  %710 = vsyncmov %s709
  %s711 = vpop.sfrf %710
  %p712 = scmp.eq.s32.totalorder %s711, 0
  %p713 = pneg %p712
  %715 = shalt.err (%p713)
  %s716 = scalar_lea.sflag [#allocation3], 6
  %717 = vsyncmov %s716
  %s718 = vpop.sfrf %717
  %p719 = scmp.eq.s32.totalorder %s718, 0
  %p720 = pneg %p719
  %722 = shalt.err (%p720)
  %s723 = scalar_lea.sflag [#allocation3], 7
  %724 = vsyncmov %s723
  %s725 = vpop.sfrf %724
  %p726 = scmp.eq.s32.totalorder %s725, 0
  %p727 = pneg %p726
  %729 = shalt.err (%p727)
  %s730 = scalar_lea.sflag [#allocation3], 8
  %731 = vsyncmov %s730
  %s732 = vpop.sfrf %731
  %p733 = scmp.eq.s32.totalorder %s732, 0
  %p734 = pneg %p733
  %736 = shalt.err (%p734)
  %s737 = scalar_lea.sflag [#allocation3], 9
  %738 = vsyncmov %s737
  %s739 = vpop.sfrf %738
  %p740 = scmp.eq.s32.totalorder %s739, 0
  %p741 = pneg %p740
  %743 = shalt.err (%p741)
  %s744 = scalar_lea.sflag [#allocation3], 10
  %745 = vsyncmov %s744
  %s746 = vpop.sfrf %745
  %p747 = scmp.eq.s32.totalorder %s746, 0
  %p748 = pneg %p747
  %750 = shalt.err (%p748)
  %s751 = scalar_lea.sflag [#allocation3], 11
  %752 = vsyncmov %s751
  %s753 = vpop.sfrf %752
  %p754 = scmp.eq.s32.totalorder %s753, 0
  %p755 = pneg %p754
  %757 = shalt.err (%p755)
  %s758 = scalar_lea.sflag [#allocation3], 12
  %759 = vsyncmov %s758
  %s760 = vpop.sfrf %759
  %p761 = scmp.eq.s32.totalorder %s760, 0
  %p762 = pneg %p761
  %764 = shalt.err (%p762)
  %s765 = scalar_lea.sflag [#allocation3], 13
  %766 = vsyncmov %s765
  %s767 = vpop.sfrf %766
  %p768 = scmp.eq.s32.totalorder %s767, 0
  %p769 = pneg %p768
  %771 = shalt.err (%p769)
  %s772 = scalar_lea.sflag [#allocation3], 14
  %773 = vsyncmov %s772
  %s774 = vpop.sfrf %773
  %p775 = scmp.eq.s32.totalorder %s774, 0
  %p776 = pneg %p775
  %778 = shalt.err (%p776)
  %s779 = scalar_lea.sflag [#allocation3], 15
  %780 = vsyncmov %s779
  %s781 = vpop.sfrf %780
  %p782 = scmp.eq.s32.totalorder %s781, 0
  %p783 = pneg %p782
  %785 = shalt.err (%p783)
  %s786 = scalar_lea.sflag [#allocation3], 16
  %787 = vsyncmov %s786
  %s788 = vpop.sfrf %787
  %p789 = scmp.eq.s32.totalorder %s788, 0
  %p790 = pneg %p789
  %792 = shalt.err (%p790)
  %s793 = scalar_lea.sflag [#allocation3], 17
  %794 = vsyncmov %s793
  %s795 = vpop.sfrf %794
  %p796 = scmp.eq.s32.totalorder %s795, 0
  %p797 = pneg %p796
  %799 = shalt.err (%p797)
  %s800 = scalar_lea.sflag [#allocation3], 18
  %801 = vsyncmov %s800
  %s802 = vpop.sfrf %801
  %p803 = scmp.eq.s32.totalorder %s802, 0
  %p804 = pneg %p803
  %806 = shalt.err (%p804)
  %s807 = scalar_lea.sflag [#allocation3], 19
  %808 = vsyncmov %s807
  %s809 = vpop.sfrf %808
  %p810 = scmp.eq.s32.totalorder %s809, 0
  %p811 = pneg %p810
  %813 = shalt.err (%p811)
  %s814 = scalar_lea.sflag [#allocation3], 20
  %815 = vsyncmov %s814
  %s816 = vpop.sfrf %815
  %p817 = scmp.eq.s32.totalorder %s816, 0
  %p818 = pneg %p817
  %820 = shalt.err (%p818)
  %s821 = scalar_lea.sflag [#allocation3], 21
  %822 = vsyncmov %s821
  %s823 = vpop.sfrf %822
  %p824 = scmp.eq.s32.totalorder %s823, 0
  %p825 = pneg %p824
  %827 = shalt.err (%p825)
  %s828 = scalar_lea.sflag [#allocation3], 22
  %829 = vsyncmov %s828
  %s830 = vpop.sfrf %829
  %p831 = scmp.eq.s32.totalorder %s830, 0
  %p832 = pneg %p831
  %834 = shalt.err (%p832)
  %s835 = scalar_lea.sflag [#allocation3], 23
  %836 = vsyncmov %s835
  %s837 = vpop.sfrf %836
  %p838 = scmp.eq.s32.totalorder %s837, 0
  %p839 = pneg %p838
  %841 = shalt.err (%p839)
  %s842 = scalar_lea.sflag [#allocation3], 24
  %843 = vsyncmov %s842
  %s844 = vpop.sfrf %843
  %p845 = scmp.eq.s32.totalorder %s844, 0
  %p846 = pneg %p845
  %848 = shalt.err (%p846)
  %s849 = scalar_lea.sflag [#allocation3], 25
  %850 = vsyncmov %s849
  %s851 = vpop.sfrf %850
  %p852 = scmp.eq.s32.totalorder %s851, 0
  %p853 = pneg %p852
  %855 = shalt.err (%p853)
  %s856 = scalar_lea.sflag [#allocation3], 26
  %857 = vsyncmov %s856
  %s858 = vpop.sfrf %857
  %p859 = scmp.eq.s32.totalorder %s858, 0
  %p860 = pneg %p859
  %862 = shalt.err (%p860)
  %s863 = scalar_lea.sflag [#allocation3], 27
  %864 = vsyncmov %s863
  %s865 = vpop.sfrf %864
  %p866 = scmp.eq.s32.totalorder %s865, 0
  %p867 = pneg %p866
  %869 = shalt.err (%p867)
  %s870 = scalar_lea.sflag [#allocation3], 28
  %871 = vsyncmov %s870
  %s872 = vpop.sfrf %871
  %p873 = scmp.eq.s32.totalorder %s872, 0
  %p874 = pneg %p873
  %876 = shalt.err (%p874)
  %s877 = scalar_lea.sflag [#allocation3], 29
  %878 = vsyncmov %s877
  %s879 = vpop.sfrf %878
  %p880 = scmp.eq.s32.totalorder %s879, 0
  %p881 = pneg %p880
  %883 = shalt.err (%p881)
  %s884 = scalar_lea.sflag [#allocation3], 30
  %885 = vsyncmov %s884
  %s886 = vpop.sfrf %885
  %p887 = scmp.eq.s32.totalorder %s886, 0
  %p888 = pneg %p887
  %890 = shalt.err (%p888)
  %s891 = scalar_lea.sflag [#allocation3], 31
  %892 = vsyncmov %s891
  %s893 = vpop.sfrf %892
  %p894 = scmp.eq.s32.totalorder %s893, 0
  %p895 = pneg %p894
  %897 = shalt.err (%p895)

</llo_original>
